<compile_context>
chip_gen: v7x
topology: tpu7x:2x2x1
jax: 0.10.0
libtpu: 0.0.40
codegen_flags: <defaults>
</compile_context>

<pallas_src>
import functools

import jax
import jax.numpy as jnp
from jax.experimental import pallas as pl
from jax.experimental.pallas import tpu as pltpu

_LANE = 128
_VMEM_LIMIT = 48 * 1024 * 1024     # scoped VMEM limit (headroom on v7x's 64 MiB)
_TILE_BUDGET = 36 * 1024 * 1024    # budget used when picking the A row-stripe height


def _round_up(v, m):
    return ((v + m - 1) // m) * m


def _choose_row_tile(num_nodes, c_pad_max):
    """Pick the A row-stripe height and padded N that fit the VMEM budget."""
    num_nodes = max(num_nodes, 1)
    cap = _round_up(num_nodes, _LANE)          # no point tiling beyond padded N
    tm = 512
    while tm > cap:
        tm //= 2
    while tm > 8:
        n_pad = _round_up(num_nodes, max(tm, _LANE))
        a_bytes = 2 * tm * n_pad * 2                 # double-buffered bf16 A stripe
        feat_bytes = n_pad * c_pad_max * 2           # resident bf16 feature matrix
        self_bytes = 2 * tm * c_pad_max * 2          # double-buffered bf16 self stripe
        out_bytes = 2 * tm * c_pad_max * 4           # double-buffered f32 output stripe
        w_bytes = 2 * c_pad_max * c_pad_max * 2 + c_pad_max * 4
        if a_bytes + feat_bytes + self_bytes + out_bytes + w_bytes <= _TILE_BUDGET:
            return tm, n_pad
        tm //= 2
    return 8, _round_up(num_nodes, _LANE)


def _sage_layer(adj, feat, w_l, w_r, bias, *, relu, out_dtype, tm):
    """One SAGEConv layer: out = (A @ feat) @ W_l + feat @ W_r + b  [+ ReLU]."""
    n_pad = adj.shape[0]
    c_in_pad = feat.shape[1]
    c_out_pad = w_l.shape[1]
    grid = (n_pad // tm,)

    def kernel(a_ref, f_ref, xs_ref, wl_ref, wr_ref, b_ref, o_ref):
        # Mean aggregation for this row stripe: bf16 MXU matmul, f32 accumulation.
        agg = jnp.dot(a_ref[...], f_ref[...], preferred_element_type=jnp.float32)
        # Neighbor projection + root projection (two MXU passes, no concat copy).
        z = jnp.dot(agg.astype(wl_ref.dtype), wl_ref[...],
                    preferred_element_type=jnp.float32)
        z = z + jnp.dot(xs_ref[...], wr_ref[...],
                        preferred_element_type=jnp.float32)
        z = z + b_ref[...]                          # f32 bias, broadcast over rows
        if relu:
            z = jnp.maximum(z, 0.0)                 # elementwise kept in f32
        o_ref[...] = z.astype(o_ref.dtype)

    flops = 2 * n_pad * n_pad * c_in_pad + 2 * 2 * n_pad * c_in_pad * c_out_pad
    bytes_accessed = (adj.size * adj.dtype.itemsize
                      + 2 * feat.size * feat.dtype.itemsize
                      + w_l.size * w_l.dtype.itemsize
                      + w_r.size * w_r.dtype.itemsize
                      + bias.size * bias.dtype.itemsize
                      + n_pad * c_out_pad * jnp.dtype(out_dtype).itemsize)

    return pl.pallas_call(
        kernel,
        out_shape=jax.ShapeDtypeStruct((n_pad, c_out_pad), out_dtype),
        grid=grid,
        in_specs=[
            pl.BlockSpec((tm, n_pad), lambda i: (i, 0)),           # A row stripe (pipelined)
            pl.BlockSpec((n_pad, c_in_pad), lambda i: (0, 0)),     # features: fully resident
            pl.BlockSpec((tm, c_in_pad), lambda i: (i, 0)),        # self-feature row stripe
            pl.BlockSpec((c_in_pad, c_out_pad), lambda i: (0, 0)), # W_l (resident)
            pl.BlockSpec((c_in_pad, c_out_pad), lambda i: (0, 0)), # W_r (resident)
            pl.BlockSpec((1, c_out_pad), lambda i: (0, 0)),        # bias (f32)
        ],
        out_specs=pl.BlockSpec((tm, c_out_pad), lambda i: (i, 0)),
        compiler_params=pltpu.CompilerParams(
            dimension_semantics=("parallel",),
            vmem_limit_bytes=_VMEM_LIMIT,
        ),
        cost_estimate=pl.CostEstimate(
            flops=flops, transcendentals=0, bytes_accessed=bytes_accessed),
    )(adj, feat, feat, w_l, w_r, bias)


def build_mean_adjacency(edge_index, num_nodes, n_pad, dtype=jnp.bfloat16):
    """Dense row-normalized in-neighborhood matrix.  Build ONCE per static graph."""
    src = edge_index[0].astype(jnp.int32)
    dst = edge_index[1].astype(jnp.int32)
    deg = jnp.zeros((num_nodes,), jnp.float32).at[dst].add(1.0)    # segment-sum degree
    inv_deg = 1.0 / jnp.maximum(deg, 1.0)
    adj = jnp.zeros((n_pad, n_pad), jnp.float32).at[dst, src].add(inv_deg[dst])
    return adj.astype(dtype)


def prepare_params(params, in_channels, hidden_channels, out_channels):
    """Pad channels to multiples of 128; weights bf16, biases stay f32."""
    ci = _round_up(in_channels, _LANE)
    ch = _round_up(hidden_channels, _LANE)
    co = _round_up(out_channels, _LANE)

    def pad2(a, rows, cols, dtype):
        out = jnp.zeros((rows, cols), dtype)
        return out.at[: a.shape[0], : a.shape[1]].set(a.astype(dtype))

    return {
        "w1l": pad2(params["w1l"], ci, ch, jnp.bfloat16),
        "w1r": pad2(params["w1r"], ci, ch, jnp.bfloat16),
        "b1": pad2(params["b1"], 1, ch, jnp.float32),
        "w2l": pad2(params["w2l"], ch, co, jnp.bfloat16),
        "w2r": pad2(params["w2r"], ch, co, jnp.bfloat16),
        "b2": pad2(params["b2"], 1, co, jnp.float32),
    }


def static_graph_encoder(x, adj, prepped, *, num_nodes, out_channels, tm):
    """Forward pass of StaticGraphEncoder: SAGEConv -> ReLU -> SAGEConv."""
    n_pad = adj.shape[0]
    ci = prepped["w1l"].shape[0]
    x_pad = jnp.zeros((n_pad, ci), jnp.bfloat16)
    x_pad = x_pad.at[: x.shape[0], : x.shape[1]].set(x.astype(jnp.bfloat16))

    h1 = _sage_layer(adj, x_pad, prepped["w1l"], prepped["w1r"], prepped["b1"],
                     relu=True, out_dtype=jnp.bfloat16, tm=tm)
    out = _sage_layer(adj, h1, prepped["w2l"], prepped["w2r"], prepped["b2"],
                      relu=False, out_dtype=jnp.float32, tm=tm)
    return out[:num_nodes, :out_channels]


def init_params(key, in_channels, hidden_channels, out_channels):
    ks = jax.random.split(key, 6)

    def lin(k, fan_in, fan_out):
        bound = 1.0 / jnp.sqrt(fan_in)
        return jax.random.uniform(k, (fan_in, fan_out), jnp.float32, -bound, bound)

    return {
        "w1l": lin(ks[0], in_channels, hidden_channels),
        "w1r": lin(ks[1], in_channels, hidden_channels),
        "b1": jax.random.uniform(ks[2], (1, hidden_channels), jnp.float32,
                                 -1.0 / jnp.sqrt(in_channels), 1.0 / jnp.sqrt(in_channels)),
        "w2l": lin(ks[3], hidden_channels, out_channels),
        "w2r": lin(ks[4], hidden_channels, out_channels),
        "b2": jax.random.uniform(ks[5], (1, out_channels), jnp.float32,
                                 -1.0 / jnp.sqrt(hidden_channels), 1.0 / jnp.sqrt(hidden_channels)),
    }


def _reference(x, edge_index, params):
    n = x.shape[0]
    src, dst = edge_index[0], edge_index[1]
    adj = jnp.zeros((n, n), jnp.float32).at[dst, src].add(1.0)
    deg = jnp.clip(jnp.sum(adj, axis=1, keepdims=True), 1.0)
    adj = adj / deg
    h1 = adj @ x @ params["w1l"] + x @ params["w1r"] + params["b1"]
    h1 = jnp.maximum(h1, 0.0)
    return adj @ h1 @ params["w2l"] + h1 @ params["w2r"] + params["b2"]


if __name__ == "__main__":
    key = jax.random.PRNGKey(0)
    k_x, k_e, k_p = jax.random.split(key, 3)

    num_nodes, num_edges = 16, 40
    in_channels, hidden_channels, out_channels = 8, 32, 16

    x = jax.random.normal(k_x, (num_nodes, in_channels), jnp.float32)
    edge_index = jax.random.randint(k_e, (2, num_edges), 0, num_nodes, jnp.int32)
    params = init_params(k_p, in_channels, hidden_channels, out_channels)

    c_pad_max = max(_round_up(c, _LANE)
                    for c in (in_channels, hidden_channels, out_channels))
    tm, n_pad = _choose_row_tile(num_nodes, c_pad_max)

    # Static graph: the normalized adjacency and padded weights are built once
    # and cached; only the two kernel calls are on the per-forward path.
    adj = build_mean_adjacency(edge_index, num_nodes, n_pad)
    prepped = prepare_params(params, in_channels, hidden_channels, out_channels)

    fwd = jax.jit(functools.partial(static_graph_encoder,
                                    num_nodes=num_nodes,
                                    out_channels=out_channels,
                                    tm=tm))
    out = jax.block_until_ready(fwd(x, adj, prepped))

    ref = _reference(x, edge_index, params)
    assert out.shape == (num_nodes, out_channels)
    # bf16 matmul operands with f32 accumulation -> relaxed tolerance vs f32 ref.
    assert jnp.allclose(out, ref, atol=1e-1, rtol=1e-1), \
        float(jnp.max(jnp.abs(out - ref)))

    print("KERNEL_OK")
</pallas_src>

<mosaic_0001>
module attributes {stable_mosaic.version = 11 : i64} {
  func.func @kernel(%arg0: i32, %arg1: memref<128x128xbf16, #tpu.memory_space<vmem>>, %arg2: memref<128x128xbf16, #tpu.memory_space<vmem>>, %arg3: memref<128x128xbf16, #tpu.memory_space<vmem>>, %arg4: memref<128x128xbf16, #tpu.memory_space<vmem>>, %arg5: memref<128x128xbf16, #tpu.memory_space<vmem>>, %arg6: memref<1x128xf32, #tpu.memory_space<vmem>>, %arg7: memref<128x128xbf16, #tpu.memory_space<vmem>>) attributes {dimension_semantics = [#tpu.dimension_semantics<parallel>], iteration_bounds = array<i64: 1>, scalar_prefetch = 0 : i64, scratch_operands = 0 : i64, tpu.core_type = #tpu.core_type<tc>, window_params = [{transform_indices = @transform_0, window_bounds = array<i64: 128, 128>}, {pipeline_mode = #tpu.pipeline_mode<synchronous>, transform_indices = @transform_1, window_bounds = array<i64: 128, 128>}, {transform_indices = @transform_2, window_bounds = array<i64: 128, 128>}, {pipeline_mode = #tpu.pipeline_mode<synchronous>, transform_indices = @transform_3, window_bounds = array<i64: 128, 128>}, {pipeline_mode = #tpu.pipeline_mode<synchronous>, transform_indices = @transform_4, window_bounds = array<i64: 128, 128>}, {pipeline_mode = #tpu.pipeline_mode<synchronous>, transform_indices = @transform_5, window_bounds = array<i64: 1, 128>}, {transform_indices = @transform_6, window_bounds = array<i64: 128, 128>}]} {
    %c0 = arith.constant 0 : index
    %c0_0 = arith.constant 0 : index
    %0 = vector.load %arg1[%c0, %c0_0] : memref<128x128xbf16, #tpu.memory_space<vmem>>, vector<128x128xbf16>
    %c0_1 = arith.constant 0 : index
    %c0_2 = arith.constant 0 : index
    %1 = vector.load %arg2[%c0_1, %c0_2] : memref<128x128xbf16, #tpu.memory_space<vmem>>, vector<128x128xbf16>
    %cst = arith.constant dense<0.000000e+00> : vector<128x128xf32>
    %2 = tpu.matmul %0, %1, %cst {dimension_numbers = #tpu.dot_dimension_numbers<[1], [0], [0], [1], [0, 0, 1, 1], [], []>} : vector<128x128xbf16>, vector<128x128xbf16>, vector<128x128xf32> -> vector<128x128xf32>
    %3 = arith.truncf %2 : vector<128x128xf32> to vector<128x128xbf16>
    %c0_3 = arith.constant 0 : index
    %c0_4 = arith.constant 0 : index
    %4 = vector.load %arg4[%c0_3, %c0_4] : memref<128x128xbf16, #tpu.memory_space<vmem>>, vector<128x128xbf16>
    %cst_5 = arith.constant dense<0.000000e+00> : vector<128x128xf32>
    %5 = tpu.matmul %3, %4, %cst_5 {dimension_numbers = #tpu.dot_dimension_numbers<[1], [0], [0], [1], [0, 0, 1, 1], [], []>} : vector<128x128xbf16>, vector<128x128xbf16>, vector<128x128xf32> -> vector<128x128xf32>
    %c0_6 = arith.constant 0 : index
    %c0_7 = arith.constant 0 : index
    %6 = vector.load %arg3[%c0_6, %c0_7] : memref<128x128xbf16, #tpu.memory_space<vmem>>, vector<128x128xbf16>
    %c0_8 = arith.constant 0 : index
    %c0_9 = arith.constant 0 : index
    %7 = vector.load %arg5[%c0_8, %c0_9] : memref<128x128xbf16, #tpu.memory_space<vmem>>, vector<128x128xbf16>
    %cst_10 = arith.constant dense<0.000000e+00> : vector<128x128xf32>
    %8 = tpu.matmul %6, %7, %cst_10 {dimension_numbers = #tpu.dot_dimension_numbers<[1], [0], [0], [1], [0, 0, 1, 1], [], []>} : vector<128x128xbf16>, vector<128x128xbf16>, vector<128x128xf32> -> vector<128x128xf32>
    %9 = arith.addf %5, %8 : vector<128x128xf32>
    %c0_11 = arith.constant 0 : index
    %c0_12 = arith.constant 0 : index
    %10 = vector.load %arg6[%c0_11, %c0_12] : memref<1x128xf32, #tpu.memory_space<vmem>>, vector<1x128xf32>
    %11 = vector.broadcast %10 : vector<1x128xf32> to vector<128x128xf32>
    %12 = arith.addf %9, %11 : vector<128x128xf32>
    %cst_13 = arith.constant 0.000000e+00 : f32
    %13 = vector.broadcast %cst_13 : f32 to vector<128x128xf32>
    %14 = arith.maximumf %12, %13 : vector<128x128xf32>
    %15 = arith.truncf %14 : vector<128x128xf32> to vector<128x128xbf16>
    %c0_14 = arith.constant 0 : index
    %c0_15 = arith.constant 0 : index
    %16 = vector.load %arg7[%c0_14, %c0_15] : memref<128x128xbf16, #tpu.memory_space<vmem>>, vector<128x128xbf16>
    tpu.vector_store %arg7[%c0_14, %c0_15], %15 {strides = array<i32>} : memref<128x128xbf16, #tpu.memory_space<vmem>>, vector<128x128xbf16>,
    return
  }
  func.func @transform_0(%arg0: i32) -> (i32, i32) {
    %c0_i32 = arith.constant 0 : i32
    %c0_i32_0 = arith.constant 0 : i32
    return %arg0, %c0_i32 : i32, i32
  }
  func.func @transform_1(%arg0: i32) -> (i32, i32) {
    %c0_i32 = arith.constant 0 : i32
    %c0_i32_0 = arith.constant 0 : i32
    %c0_i32_1 = arith.constant 0 : i32
    return %c0_i32, %c0_i32_0 : i32, i32
  }
  func.func @transform_2(%arg0: i32) -> (i32, i32) {
    %c0_i32 = arith.constant 0 : i32
    %c0_i32_0 = arith.constant 0 : i32
    return %arg0, %c0_i32 : i32, i32
  }
  func.func @transform_3(%arg0: i32) -> (i32, i32) {
    %c0_i32 = arith.constant 0 : i32
    %c0_i32_0 = arith.constant 0 : i32
    %c0_i32_1 = arith.constant 0 : i32
    return %c0_i32, %c0_i32_0 : i32, i32
  }
  func.func @transform_4(%arg0: i32) -> (i32, i32) {
    %c0_i32 = arith.constant 0 : i32
    %c0_i32_0 = arith.constant 0 : i32
    %c0_i32_1 = arith.constant 0 : i32
    return %c0_i32, %c0_i32_0 : i32, i32
  }
  func.func @transform_5(%arg0: i32) -> (i32, i32) {
    %c0_i32 = arith.constant 0 : i32
    %c0_i32_0 = arith.constant 0 : i32
    %c0_i32_1 = arith.constant 0 : i32
    return %c0_i32, %c0_i32_0 : i32, i32
  }
  func.func @transform_6(%arg0: i32) -> (i32, i32) {
    %c0_i32 = arith.constant 0 : i32
    %c0_i32_0 = arith.constant 0 : i32
    return %arg0, %c0_i32 : i32, i32
  }
}

module attributes {stable_mosaic.version = 11 : i64} {
  func.func @kernel(%arg0: i32, %arg1: memref<128x128xbf16, #tpu.memory_space<vmem>>, %arg2: memref<128x128xbf16, #tpu.memory_space<vmem>>, %arg3: memref<128x128xbf16, #tpu.memory_space<vmem>>, %arg4: memref<128x128xbf16, #tpu.memory_space<vmem>>, %arg5: memref<128x128xbf16, #tpu.memory_space<vmem>>, %arg6: memref<1x128xf32, #tpu.memory_space<vmem>>, %arg7: memref<128x128xf32, #tpu.memory_space<vmem>>) attributes {dimension_semantics = [#tpu.dimension_semantics<parallel>], iteration_bounds = array<i64: 1>, scalar_prefetch = 0 : i64, scratch_operands = 0 : i64, tpu.core_type = #tpu.core_type<tc>, window_params = [{transform_indices = @transform_0, window_bounds = array<i64: 128, 128>}, {pipeline_mode = #tpu.pipeline_mode<synchronous>, transform_indices = @transform_1, window_bounds = array<i64: 128, 128>}, {transform_indices = @transform_2, window_bounds = array<i64: 128, 128>}, {pipeline_mode = #tpu.pipeline_mode<synchronous>, transform_indices = @transform_3, window_bounds = array<i64: 128, 128>}, {pipeline_mode = #tpu.pipeline_mode<synchronous>, transform_indices = @transform_4, window_bounds = array<i64: 128, 128>}, {pipeline_mode = #tpu.pipeline_mode<synchronous>, transform_indices = @transform_5, window_bounds = array<i64: 1, 128>}, {transform_indices = @transform_6, window_bounds = array<i64: 128, 128>}]} {
    %c0 = arith.constant 0 : index
    %c0_0 = arith.constant 0 : index
    %0 = vector.load %arg1[%c0, %c0_0] : memref<128x128xbf16, #tpu.memory_space<vmem>>, vector<128x128xbf16>
    %c0_1 = arith.constant 0 : index
    %c0_2 = arith.constant 0 : index
    %1 = vector.load %arg2[%c0_1, %c0_2] : memref<128x128xbf16, #tpu.memory_space<vmem>>, vector<128x128xbf16>
    %cst = arith.constant dense<0.000000e+00> : vector<128x128xf32>
    %2 = tpu.matmul %0, %1, %cst {dimension_numbers = #tpu.dot_dimension_numbers<[1], [0], [0], [1], [0, 0, 1, 1], [], []>} : vector<128x128xbf16>, vector<128x128xbf16>, vector<128x128xf32> -> vector<128x128xf32>
    %3 = arith.truncf %2 : vector<128x128xf32> to vector<128x128xbf16>
    %c0_3 = arith.constant 0 : index
    %c0_4 = arith.constant 0 : index
    %4 = vector.load %arg4[%c0_3, %c0_4] : memref<128x128xbf16, #tpu.memory_space<vmem>>, vector<128x128xbf16>
    %cst_5 = arith.constant dense<0.000000e+00> : vector<128x128xf32>
    %5 = tpu.matmul %3, %4, %cst_5 {dimension_numbers = #tpu.dot_dimension_numbers<[1], [0], [0], [1], [0, 0, 1, 1], [], []>} : vector<128x128xbf16>, vector<128x128xbf16>, vector<128x128xf32> -> vector<128x128xf32>
    %c0_6 = arith.constant 0 : index
    %c0_7 = arith.constant 0 : index
    %6 = vector.load %arg3[%c0_6, %c0_7] : memref<128x128xbf16, #tpu.memory_space<vmem>>, vector<128x128xbf16>
    %c0_8 = arith.constant 0 : index
    %c0_9 = arith.constant 0 : index
    %7 = vector.load %arg5[%c0_8, %c0_9] : memref<128x128xbf16, #tpu.memory_space<vmem>>, vector<128x128xbf16>
    %cst_10 = arith.constant dense<0.000000e+00> : vector<128x128xf32>
    %8 = tpu.matmul %6, %7, %cst_10 {dimension_numbers = #tpu.dot_dimension_numbers<[1], [0], [0], [1], [0, 0, 1, 1], [], []>} : vector<128x128xbf16>, vector<128x128xbf16>, vector<128x128xf32> -> vector<128x128xf32>
    %9 = arith.addf %5, %8 : vector<128x128xf32>
    %c0_11 = arith.constant 0 : index
    %c0_12 = arith.constant 0 : index
    %10 = vector.load %arg6[%c0_11, %c0_12] : memref<1x128xf32, #tpu.memory_space<vmem>>, vector<1x128xf32>
    %11 = vector.broadcast %10 : vector<1x128xf32> to vector<128x128xf32>
    %12 = arith.addf %9, %11 : vector<128x128xf32>
    %c0_13 = arith.constant 0 : index
    %c0_14 = arith.constant 0 : index
    %13 = vector.load %arg7[%c0_13, %c0_14] : memref<128x128xf32, #tpu.memory_space<vmem>>, vector<128x128xf32>
    tpu.vector_store %arg7[%c0_13, %c0_14], %12 {strides = array<i32>} : memref<128x128xf32, #tpu.memory_space<vmem>>, vector<128x128xf32>,
    return
  }
  func.func @transform_0(%arg0: i32) -> (i32, i32) {
    %c0_i32 = arith.constant 0 : i32
    %c0_i32_0 = arith.constant 0 : i32
    return %arg0, %c0_i32 : i32, i32
  }
  func.func @transform_1(%arg0: i32) -> (i32, i32) {
    %c0_i32 = arith.constant 0 : i32
    %c0_i32_0 = arith.constant 0 : i32
    %c0_i32_1 = arith.constant 0 : i32
    return %c0_i32, %c0_i32_0 : i32, i32
  }
  func.func @transform_2(%arg0: i32) -> (i32, i32) {
    %c0_i32 = arith.constant 0 : i32
    %c0_i32_0 = arith.constant 0 : i32
    return %arg0, %c0_i32 : i32, i32
  }
  func.func @transform_3(%arg0: i32) -> (i32, i32) {
    %c0_i32 = arith.constant 0 : i32
    %c0_i32_0 = arith.constant 0 : i32
    %c0_i32_1 = arith.constant 0 : i32
    return %c0_i32, %c0_i32_0 : i32, i32
  }
  func.func @transform_4(%arg0: i32) -> (i32, i32) {
    %c0_i32 = arith.constant 0 : i32
    %c0_i32_0 = arith.constant 0 : i32
    %c0_i32_1 = arith.constant 0 : i32
    return %c0_i32, %c0_i32_0 : i32, i32
  }
  func.func @transform_5(%arg0: i32) -> (i32, i32) {
    %c0_i32 = arith.constant 0 : i32
    %c0_i32_0 = arith.constant 0 : i32
    %c0_i32_1 = arith.constant 0 : i32
    return %c0_i32, %c0_i32_0 : i32, i32
  }
  func.func @transform_6(%arg0: i32) -> (i32, i32) {
    %c0_i32 = arith.constant 0 : i32
    %c0_i32_0 = arith.constant 0 : i32
    return %arg0, %c0_i32 : i32, i32
  }
}

</mosaic_0001>

<llo_original>
// kernel: static_graph_encoder.3
$region0: #{static_graph_encoder.3}
  #allocation0 [shape = 'u32[]', space=smem, size = 0x4, offset = 0x4, fixed_abs, tag = 'smem constant byte address 0x4 - core index']
  #allocation1 [shape = 'u32[144,128]{1,0:T(1,128)}', space=vmem, size = 0x12000, scoped, tag = 'internal scratch']
  %s0 = inlined_call_operand.vmem [shape: bf16[128,128], index: 0, kind: input, shape index: {}]
  %s1 = inlined_call_operand.vmem [shape: bf16[128,128], index: 1, kind: input, shape index: {}, may-alias: {1,2}]
  %s2 = inlined_call_operand.vmem [shape: bf16[128,128], index: 2, kind: input, shape index: {}, may-alias: {1,2}]
  %s3 = inlined_call_operand.vmem [shape: bf16[128,128], index: 3, kind: input, shape index: {}]
  %s4 = inlined_call_operand.vmem [shape: bf16[128,128], index: 4, kind: input, shape index: {}]
  %s5 = inlined_call_operand.vmem [shape: f32[1,128], index: 5, kind: input, shape index: {}]
  %s6 = inlined_call_operand.vmem [shape: f32[128,128], index: 6, kind: output, shape index: {}]
  %s7 = sld [smem:[#allocation0]]
  $region34: #{static_graph_encoder.3} parent=0
    _
  %s9 = ssub.s32 1, %s7
  %s10 = scalar_select 0, %s9, %s7
  // Predicated region
  $region2: #{static_graph_encoder.3} parent=0 // pred_check
    _
  $region3: #{static_graph_encoder.3} parent=0 // pred_check_branch
    %12 = sbr.rel (0) target = $region5
  $region4: #{static_graph_encoder.3} parent=0 // pred_region
    _
  $region5: #{static_graph_encoder.3} parent=0 // pred_fallthru
    _
  // Predicated region
  $region6: #{static_graph_encoder.3} parent=0 // pred_check
    _
  $region7: #{static_graph_encoder.3} parent=0 // pred_check_branch
    %14 = sbr.rel (0) target = $region9
  $region8: #{static_graph_encoder.3} parent=0 // pred_region
    _
  $region9: #{static_graph_encoder.3} parent=0 // pred_fallthru
    _
  // Predicated region
  $region10: #{static_graph_encoder.3} parent=0 // pred_check
    _
  $region11: #{static_graph_encoder.3} parent=0 // pred_check_branch
    %16 = sbr.rel (0) target = $region13
  $region12: #{static_graph_encoder.3} parent=0 // pred_region
    _
  $region13: #{static_graph_encoder.3} parent=0 // pred_fallthru
    _
  // Predicated region
  $region14: #{static_graph_encoder.3} parent=0 // pred_check
    _
  $region15: #{static_graph_encoder.3} parent=0 // pred_check_branch
    %18 = sbr.rel (0) target = $region17
  $region16: #{static_graph_encoder.3} parent=0 // pred_region
    _
  $region17: #{static_graph_encoder.3} parent=0 // pred_fallthru
    _
  // Predicated region
  $region18: #{static_graph_encoder.3} parent=0 // pred_check
    _
  $region19: #{static_graph_encoder.3} parent=0 // pred_check_branch
    %20 = sbr.rel (0) target = $region21
  $region20: #{static_graph_encoder.3} parent=0 // pred_region
    _
  $region21: #{static_graph_encoder.3} parent=0 // pred_fallthru
    _
  // Predicated region
  $region22: #{static_graph_encoder.3} parent=0 // pred_check
    _
  $region23: #{static_graph_encoder.3} parent=0 // pred_check_branch
    %22 = sbr.rel (0) target = $region25
  $region24: #{static_graph_encoder.3} parent=0 // pred_region
    _
  $region25: #{static_graph_encoder.3} parent=0 // pred_fallthru
    _
  %v24 = vld [vmem:[%s0] sm:$0xf]
  %v25 = vld [vmem:[%s0 + $0x4] sm:$0xf]
  %v26 = vld [vmem:[%s0 + $0x8] sm:$0xf]
  %v27 = vld [vmem:[%s0 + $0xc] sm:$0xf]
  %v28 = vld [vmem:[%s0 + $0x10] sm:$0xf]
  %v29 = vld [vmem:[%s0 + $0x14] sm:$0xf]
  %v30 = vld [vmem:[%s0 + $0x18] sm:$0xf]
  %v31 = vld [vmem:[%s0 + $0x1c] sm:$0xf]
  %v32 = vld [vmem:[%s0 + $0x20] sm:$0xf]
  %v33 = vld [vmem:[%s0 + $0x24] sm:$0xf]
  %v34 = vld [vmem:[%s0 + $0x28] sm:$0xf]
  %v35 = vld [vmem:[%s0 + $0x2c] sm:$0xf]
  %v36 = vld [vmem:[%s0 + $0x30] sm:$0xf]
  %v37 = vld [vmem:[%s0 + $0x34] sm:$0xf]
  %v38 = vld [vmem:[%s0 + $0x38] sm:$0xf]
  %v39 = vld [vmem:[%s0 + $0x3c] sm:$0xf]
  %v40 = vld [vmem:[%s1] sm:$0xf]
  %v41 = vld [vmem:[%s1 + $0x4] sm:$0xf]
  %v42 = vld [vmem:[%s1 + $0x8] sm:$0xf]
  %v43 = vld [vmem:[%s1 + $0xc] sm:$0xf]
  %v44 = vld [vmem:[%s1 + $0x10] sm:$0xf]
  %v45 = vld [vmem:[%s1 + $0x14] sm:$0xf]
  %v46 = vld [vmem:[%s1 + $0x18] sm:$0xf]
  %v47 = vld [vmem:[%s1 + $0x1c] sm:$0xf]
  %v48 = vld [vmem:[%s1 + $0x20] sm:$0xf]
  %v49 = vld [vmem:[%s1 + $0x24] sm:$0xf]
  %v50 = vld [vmem:[%s1 + $0x28] sm:$0xf]
  %v51 = vld [vmem:[%s1 + $0x2c] sm:$0xf]
  %v52 = vld [vmem:[%s1 + $0x30] sm:$0xf]
  %v53 = vld [vmem:[%s1 + $0x34] sm:$0xf]
  %v54 = vld [vmem:[%s1 + $0x38] sm:$0xf]
  %v55 = vld [vmem:[%s1 + $0x3c] sm:$0xf]
  %v72 = vunpack.c.l.b16 %v24
  %v73 = vunpack.c.l.b16 %v25
  %v74 = vunpack.c.l.b16 %v26
  %v75 = vunpack.c.l.b16 %v27
  %v76 = vunpack.c.l.b16 %v28
  %v77 = vunpack.c.l.b16 %v29
  %v78 = vunpack.c.l.b16 %v30
  %v79 = vunpack.c.l.b16 %v31
  %v80 = vunpack.c.l.b16 %v32
  %v81 = vunpack.c.l.b16 %v33
  %v82 = vunpack.c.l.b16 %v34
  %v83 = vunpack.c.l.b16 %v35
  %v84 = vunpack.c.l.b16 %v36
  %v85 = vunpack.c.l.b16 %v37
  %v86 = vunpack.c.l.b16 %v38
  %v87 = vunpack.c.l.b16 %v39
  %v88 = vpack.c.b16 %v73, %v72
  %v89 = vpack.c.b16 %v75, %v74
  %v90 = vpack.c.b16 %v77, %v76
  %v91 = vpack.c.b16 %v79, %v78
  %v92 = vpack.c.b16 %v81, %v80
  %v93 = vpack.c.b16 %v83, %v82
  %v94 = vpack.c.b16 %v85, %v84
  %v95 = vpack.c.b16 %v87, %v86
  %v120 = vunpack.c.l.b16 %v40
  %v121 = vunpack.c.l.b16 %v41
  %v122 = vunpack.c.l.b16 %v42
  %v123 = vunpack.c.l.b16 %v43
  %v124 = vunpack.c.l.b16 %v44
  %v125 = vunpack.c.l.b16 %v45
  %v126 = vunpack.c.l.b16 %v46
  %v127 = vunpack.c.l.b16 %v47
  %v128 = vunpack.c.l.b16 %v48
  %v129 = vunpack.c.l.b16 %v49
  %v130 = vunpack.c.l.b16 %v50
  %v131 = vunpack.c.l.b16 %v51
  %v132 = vunpack.c.l.b16 %v52
  %v133 = vunpack.c.l.b16 %v53
  %v134 = vunpack.c.l.b16 %v54
  %v135 = vunpack.c.l.b16 %v55
  %v136 = vpack.c.b16 %v121, %v120
  %v137 = vpack.c.b16 %v123, %v122
  %v138 = vpack.c.b16 %v125, %v124
  %v139 = vpack.c.b16 %v127, %v126
  %v140 = vpack.c.b16 %v129, %v128
  %v141 = vpack.c.b16 %v131, %v130
  %v142 = vpack.c.b16 %v133, %v132
  %v143 = vpack.c.b16 %v135, %v134
  %152 = vmatprep.subr.bf16.mxu0 0
  %153 = vmatpush1.bf16.msra.mxu0 %v136
  %154 = vmatprep.subr.bf16.mxu0 0
  %155 = vmatpush1.bf16.msra.mxu0 %v137
  %156 = vmatprep.subr.bf16.mxu0 0
  %157 = vmatpush1.bf16.msra.mxu0 %v138
  %158 = vmatprep.subr.bf16.mxu0 0
  %159 = vmatpush1.bf16.msra.mxu0 %v139
  %160 = vmatprep.subr.bf16.mxu0 0
  %161 = vmatpush1.bf16.msra.mxu0 %v140
  %162 = vmatprep.subr.bf16.mxu0 0
  %163 = vmatpush1.bf16.msra.mxu0 %v141
  %164 = vmatprep.subr.bf16.mxu0 0
  %165 = vmatpush1.bf16.msra.mxu0 %v142
  %166 = vmatprep.subr.bf16.mxu0 0
  %167 = vmatpush1.bf16.msra.mxu0 %v143
  %168 = vmatprep.subr.bf16.mxu0 0
  %169 = vmatpush1.bf16.msra.mxu0 0
  %170 = vmatprep.subr.bf16.mxu0 0
  %171 = vmatpush1.bf16.msra.mxu0 0
  %172 = vmatprep.subr.bf16.mxu0 0
  %173 = vmatpush1.bf16.msra.mxu0 0
  %174 = vmatprep.subr.bf16.mxu0 0
  %175 = vmatpush1.bf16.msra.mxu0 0
  %176 = vmatprep.subr.bf16.mxu0 0
  %177 = vmatpush1.bf16.msra.mxu0 0
  %178 = vmatprep.subr.bf16.mxu0 0
  %179 = vmatpush1.bf16.msra.mxu0 0
  %180 = vmatprep.subr.bf16.mxu0 0
  %181 = vmatpush1.bf16.msra.mxu0 0
  %182 = vmatprep.subr.bf16.mxu0 0
  %183 = vmatpush1.bf16.msra.mxu0 0
  %184 = vmatprep.mubr.bf16.mxu0 0
  %185 = vmatmul.mubr.bf16.gmra.mrb[0].mxu0 %v88
  %v186 = vpop.f32.mrb[0].mxu0
  %v187 = vadd.f32 0.0, %v186
  %v188 = vpop.f32.mrb[0].mxu0
  %v189 = vpop.f32.mrb[0].mxu0
  %v190 = vadd.f32 0.0, %v189
  %v191 = vpop.f32.mrb[0].mxu0
  %192 = vmatprep.mubr.bf16.mxu0 0
  %193 = vmatmul.mubr.bf16.gmra.mrb[0].mxu0 %v89
  %v194 = vpop.f32.mrb[0].mxu0
  %v195 = vadd.f32 0.0, %v194
  %v196 = vpop.f32.mrb[0].mxu0
  %v197 = vpop.f32.mrb[0].mxu0
  %v198 = vadd.f32 0.0, %v197
  %v199 = vpop.f32.mrb[0].mxu0
  %200 = vmatprep.mubr.bf16.mxu0 0
  %201 = vmatmul.mubr.bf16.gmra.mrb[0].mxu0 %v90
  %v202 = vpop.f32.mrb[0].mxu0
  %v203 = vadd.f32 0.0, %v202
  %v204 = vpop.f32.mrb[0].mxu0
  %v205 = vpop.f32.mrb[0].mxu0
  %v206 = vadd.f32 0.0, %v205
  %v207 = vpop.f32.mrb[0].mxu0
  %208 = vmatprep.mubr.bf16.mxu0 0
  %209 = vmatmul.mubr.bf16.gmra.mrb[0].mxu0 %v91
  %v210 = vpop.f32.mrb[0].mxu0
  %v211 = vadd.f32 0.0, %v210
  %v212 = vpop.f32.mrb[0].mxu0
  %v213 = vpop.f32.mrb[0].mxu0
  %v214 = vadd.f32 0.0, %v213
  %v215 = vpop.f32.mrb[0].mxu0
  %216 = vmatprep.mubr.bf16.mxu0 0
  %217 = vmatmul.mubr.bf16.gmra.mrb[0].mxu0 %v92
  %v218 = vpop.f32.mrb[0].mxu0
  %v219 = vadd.f32 0.0, %v218
  %v220 = vpop.f32.mrb[0].mxu0
  %v221 = vpop.f32.mrb[0].mxu0
  %v222 = vadd.f32 0.0, %v221
  %v223 = vpop.f32.mrb[0].mxu0
  %224 = vmatprep.mubr.bf16.mxu0 0
  %225 = vmatmul.mubr.bf16.gmra.mrb[0].mxu0 %v93
  %v226 = vpop.f32.mrb[0].mxu0
  %v227 = vadd.f32 0.0, %v226
  %v228 = vpop.f32.mrb[0].mxu0
  %v229 = vpop.f32.mrb[0].mxu0
  %v230 = vadd.f32 0.0, %v229
  %v231 = vpop.f32.mrb[0].mxu0
  %232 = vmatprep.mubr.bf16.mxu0 0
  %233 = vmatmul.mubr.bf16.gmra.mrb[0].mxu0 %v94
  %v234 = vpop.f32.mrb[0].mxu0
  %v235 = vadd.f32 0.0, %v234
  %v236 = vpop.f32.mrb[0].mxu0
  %v237 = vpop.f32.mrb[0].mxu0
  %v238 = vadd.f32 0.0, %v237
  %v239 = vpop.f32.mrb[0].mxu0
  %240 = vmatprep.mubr.bf16.mxu0 0
  %241 = vmatmul.mubr.bf16.gmra.mrb[0].mxu0 %v95
  %v242 = vpop.f32.mrb[0].mxu0
  %v243 = vadd.f32 0.0, %v242
  %v244 = vpop.f32.mrb[0].mxu0
  %v245 = vpop.f32.mrb[0].mxu0
  %v246 = vadd.f32 0.0, %v245
  %v247 = vpop.f32.mrb[0].mxu0
  %248 = vdwg.mxu0
  %v249 = vpack.c.bf16 %v190, %v187
  %v250 = vpack.c.bf16 %v198, %v195
  %v251 = vpack.c.bf16 %v206, %v203
  %v252 = vpack.c.bf16 %v214, %v211
  %v253 = vpack.c.bf16 %v222, %v219
  %v254 = vpack.c.bf16 %v230, %v227
  %v255 = vpack.c.bf16 %v238, %v235
  %v256 = vpack.c.bf16 %v246, %v243
  %v257 = vld [vmem:[%s3] sm:$0xf]
  %v258 = vld [vmem:[%s3 + $0x4] sm:$0xf]
  %v259 = vld [vmem:[%s3 + $0x8] sm:$0xf]
  %v260 = vld [vmem:[%s3 + $0xc] sm:$0xf]
  %v261 = vld [vmem:[%s3 + $0x10] sm:$0xf]
  %v262 = vld [vmem:[%s3 + $0x14] sm:$0xf]
  %v263 = vld [vmem:[%s3 + $0x18] sm:$0xf]
  %v264 = vld [vmem:[%s3 + $0x1c] sm:$0xf]
  %v265 = vld [vmem:[%s3 + $0x20] sm:$0xf]
  %v266 = vld [vmem:[%s3 + $0x24] sm:$0xf]
  %v267 = vld [vmem:[%s3 + $0x28] sm:$0xf]
  %v268 = vld [vmem:[%s3 + $0x2c] sm:$0xf]
  %v269 = vld [vmem:[%s3 + $0x30] sm:$0xf]
  %v270 = vld [vmem:[%s3 + $0x34] sm:$0xf]
  %v271 = vld [vmem:[%s3 + $0x38] sm:$0xf]
  %v272 = vld [vmem:[%s3 + $0x3c] sm:$0xf]
  %v273 = vld [vmem:[%s2] sm:$0xf]
  %v274 = vld [vmem:[%s2 + $0x4] sm:$0xf]
  %v275 = vld [vmem:[%s2 + $0x8] sm:$0xf]
  %v276 = vld [vmem:[%s2 + $0xc] sm:$0xf]
  %v277 = vld [vmem:[%s2 + $0x10] sm:$0xf]
  %v278 = vld [vmem:[%s2 + $0x14] sm:$0xf]
  %v279 = vld [vmem:[%s2 + $0x18] sm:$0xf]
  %v280 = vld [vmem:[%s2 + $0x1c] sm:$0xf]
  %v281 = vld [vmem:[%s2 + $0x20] sm:$0xf]
  %v282 = vld [vmem:[%s2 + $0x24] sm:$0xf]
  %v283 = vld [vmem:[%s2 + $0x28] sm:$0xf]
  %v284 = vld [vmem:[%s2 + $0x2c] sm:$0xf]
  %v285 = vld [vmem:[%s2 + $0x30] sm:$0xf]
  %v286 = vld [vmem:[%s2 + $0x34] sm:$0xf]
  %v287 = vld [vmem:[%s2 + $0x38] sm:$0xf]
  %v288 = vld [vmem:[%s2 + $0x3c] sm:$0xf]
  %v289 = vld [vmem:[%s4] sm:$0xf]
  %v290 = vld [vmem:[%s4 + $0x4] sm:$0xf]
  %v291 = vld [vmem:[%s4 + $0x8] sm:$0xf]
  %v292 = vld [vmem:[%s4 + $0xc] sm:$0xf]
  %v293 = vld [vmem:[%s4 + $0x10] sm:$0xf]
  %v294 = vld [vmem:[%s4 + $0x14] sm:$0xf]
  %v295 = vld [vmem:[%s4 + $0x18] sm:$0xf]
  %v296 = vld [vmem:[%s4 + $0x1c] sm:$0xf]
  %v297 = vld [vmem:[%s4 + $0x20] sm:$0xf]
  %v298 = vld [vmem:[%s4 + $0x24] sm:$0xf]
  %v299 = vld [vmem:[%s4 + $0x28] sm:$0xf]
  %v300 = vld [vmem:[%s4 + $0x2c] sm:$0xf]
  %v301 = vld [vmem:[%s4 + $0x30] sm:$0xf]
  %v302 = vld [vmem:[%s4 + $0x34] sm:$0xf]
  %v303 = vld [vmem:[%s4 + $0x38] sm:$0xf]
  %v304 = vld [vmem:[%s4 + $0x3c] sm:$0xf]
  %v321 = vunpack.c.l.b16 %v273
  %v322 = vunpack.c.l.b16 %v274
  %v323 = vunpack.c.l.b16 %v275
  %v324 = vunpack.c.l.b16 %v276
  %v325 = vunpack.c.l.b16 %v277
  %v326 = vunpack.c.l.b16 %v278
  %v327 = vunpack.c.l.b16 %v279
  %v328 = vunpack.c.l.b16 %v280
  %v329 = vunpack.c.l.b16 %v281
  %v330 = vunpack.c.l.b16 %v282
  %v331 = vunpack.c.l.b16 %v283
  %v332 = vunpack.c.l.b16 %v284
  %v333 = vunpack.c.l.b16 %v285
  %v334 = vunpack.c.l.b16 %v286
  %v335 = vunpack.c.l.b16 %v287
  %v336 = vunpack.c.l.b16 %v288
  %v337 = vpack.c.b16 %v322, %v321
  %v338 = vpack.c.b16 %v324, %v323
  %v339 = vpack.c.b16 %v326, %v325
  %v340 = vpack.c.b16 %v328, %v327
  %v341 = vpack.c.b16 %v330, %v329
  %v342 = vpack.c.b16 %v332, %v331
  %v343 = vpack.c.b16 %v334, %v333
  %v344 = vpack.c.b16 %v336, %v335
  %v369 = vunpack.c.l.b16 %v289
  %v370 = vunpack.c.l.b16 %v290
  %v371 = vunpack.c.l.b16 %v291
  %v372 = vunpack.c.l.b16 %v292
  %v373 = vunpack.c.l.b16 %v293
  %v374 = vunpack.c.l.b16 %v294
  %v375 = vunpack.c.l.b16 %v295
  %v376 = vunpack.c.l.b16 %v296
  %v377 = vunpack.c.l.b16 %v297
  %v378 = vunpack.c.l.b16 %v298
  %v379 = vunpack.c.l.b16 %v299
  %v380 = vunpack.c.l.b16 %v300
  %v381 = vunpack.c.l.b16 %v301
  %v382 = vunpack.c.l.b16 %v302
  %v383 = vunpack.c.l.b16 %v303
  %v384 = vunpack.c.l.b16 %v304
  %v385 = vpack.c.b16 %v370, %v369
  %v386 = vpack.c.b16 %v372, %v371
  %v387 = vpack.c.b16 %v374, %v373
  %v388 = vpack.c.b16 %v376, %v375
  %v389 = vpack.c.b16 %v378, %v377
  %v390 = vpack.c.b16 %v380, %v379
  %v391 = vpack.c.b16 %v382, %v381
  %v392 = vpack.c.b16 %v384, %v383
  %401 = vmatprep.subr.bf16.mxu0 0
  %402 = vmatpush1.bf16.msra.mxu0 %v385
  %403 = vmatprep.subr.bf16.mxu0 0
  %404 = vmatpush1.bf16.msra.mxu0 %v386
  %405 = vmatprep.subr.bf16.mxu0 0
  %406 = vmatpush1.bf16.msra.mxu0 %v387
  %407 = vmatprep.subr.bf16.mxu0 0
  %408 = vmatpush1.bf16.msra.mxu0 %v388
  %409 = vmatprep.subr.bf16.mxu0 0
  %410 = vmatpush1.bf16.msra.mxu0 %v389
  %411 = vmatprep.subr.bf16.mxu0 0
  %412 = vmatpush1.bf16.msra.mxu0 %v390
  %413 = vmatprep.subr.bf16.mxu0 0
  %414 = vmatpush1.bf16.msra.mxu0 %v391
  %415 = vmatprep.subr.bf16.mxu0 0
  %416 = vmatpush1.bf16.msra.mxu0 %v392
  %417 = vmatprep.subr.bf16.mxu0 0
  %418 = vmatpush1.bf16.msra.mxu0 0
  %419 = vmatprep.subr.bf16.mxu0 0
  %420 = vmatpush1.bf16.msra.mxu0 0
  %421 = vmatprep.subr.bf16.mxu0 0
  %422 = vmatpush1.bf16.msra.mxu0 0
  %423 = vmatprep.subr.bf16.mxu0 0
  %424 = vmatpush1.bf16.msra.mxu0 0
  %425 = vmatprep.subr.bf16.mxu0 0
  %426 = vmatpush1.bf16.msra.mxu0 0
  %427 = vmatprep.subr.bf16.mxu0 0
  %428 = vmatpush1.bf16.msra.mxu0 0
  %429 = vmatprep.subr.bf16.mxu0 0
  %430 = vmatpush1.bf16.msra.mxu0 0
  %431 = vmatprep.subr.bf16.mxu0 0
  %432 = vmatpush1.bf16.msra.mxu0 0
  %433 = vmatprep.mubr.bf16.mxu0 0
  %434 = vmatmul.mubr.bf16.gmra.mrb[0].mxu0 %v337
  %v435 = vpop.f32.mrb[0].mxu0
  %v436 = vadd.f32 0.0, %v435
  %v437 = vpop.f32.mrb[0].mxu0
  %v438 = vpop.f32.mrb[0].mxu0
  %v439 = vadd.f32 0.0, %v438
  %v440 = vpop.f32.mrb[0].mxu0
  %441 = vmatprep.mubr.bf16.mxu0 0
  %442 = vmatmul.mubr.bf16.gmra.mrb[0].mxu0 %v338
  %v443 = vpop.f32.mrb[0].mxu0
  %v444 = vadd.f32 0.0, %v443
  %v445 = vpop.f32.mrb[0].mxu0
  %v446 = vpop.f32.mrb[0].mxu0
  %v447 = vadd.f32 0.0, %v446
  %v448 = vpop.f32.mrb[0].mxu0
  %449 = vmatprep.mubr.bf16.mxu0 0
  %450 = vmatmul.mubr.bf16.gmra.mrb[0].mxu0 %v339
  %v451 = vpop.f32.mrb[0].mxu0
  %v452 = vadd.f32 0.0, %v451
  %v453 = vpop.f32.mrb[0].mxu0
  %v454 = vpop.f32.mrb[0].mxu0
  %v455 = vadd.f32 0.0, %v454
  %v456 = vpop.f32.mrb[0].mxu0
  %457 = vmatprep.mubr.bf16.mxu0 0
  %458 = vmatmul.mubr.bf16.gmra.mrb[0].mxu0 %v340
  %v459 = vpop.f32.mrb[0].mxu0
  %v460 = vadd.f32 0.0, %v459
  %v461 = vpop.f32.mrb[0].mxu0
  %v462 = vpop.f32.mrb[0].mxu0
  %v463 = vadd.f32 0.0, %v462
  %v464 = vpop.f32.mrb[0].mxu0
  %465 = vmatprep.mubr.bf16.mxu0 0
  %466 = vmatmul.mubr.bf16.gmra.mrb[0].mxu0 %v341
  %v467 = vpop.f32.mrb[0].mxu0
  %v468 = vadd.f32 0.0, %v467
  %v469 = vpop.f32.mrb[0].mxu0
  %v470 = vpop.f32.mrb[0].mxu0
  %v471 = vadd.f32 0.0, %v470
  %v472 = vpop.f32.mrb[0].mxu0
  %473 = vmatprep.mubr.bf16.mxu0 0
  %474 = vmatmul.mubr.bf16.gmra.mrb[0].mxu0 %v342
  %v475 = vpop.f32.mrb[0].mxu0
  %v476 = vadd.f32 0.0, %v475
  %v477 = vpop.f32.mrb[0].mxu0
  %v478 = vpop.f32.mrb[0].mxu0
  %v479 = vadd.f32 0.0, %v478
  %v480 = vpop.f32.mrb[0].mxu0
  %481 = vmatprep.mubr.bf16.mxu0 0
  %482 = vmatmul.mubr.bf16.gmra.mrb[0].mxu0 %v343
  %v483 = vpop.f32.mrb[0].mxu0
  %v484 = vadd.f32 0.0, %v483
  %v485 = vpop.f32.mrb[0].mxu0
  %v486 = vpop.f32.mrb[0].mxu0
  %v487 = vadd.f32 0.0, %v486
  %v488 = vpop.f32.mrb[0].mxu0
  %489 = vmatprep.mubr.bf16.mxu0 0
  %490 = vmatmul.mubr.bf16.gmra.mrb[0].mxu0 %v344
  %v491 = vpop.f32.mrb[0].mxu0
  %v492 = vadd.f32 0.0, %v491
  %v493 = vpop.f32.mrb[0].mxu0
  %v494 = vpop.f32.mrb[0].mxu0
  %v495 = vadd.f32 0.0, %v494
  %v496 = vpop.f32.mrb[0].mxu0
  %497 = vdwg.mxu0
  %v514 = vunpack.c.l.b16 %v257
  %v515 = vunpack.c.l.b16 %v258
  %v516 = vunpack.c.l.b16 %v259
  %v517 = vunpack.c.l.b16 %v260
  %v518 = vunpack.c.l.b16 %v261
  %v519 = vunpack.c.l.b16 %v262
  %v520 = vunpack.c.l.b16 %v263
  %v521 = vunpack.c.l.b16 %v264
  %v522 = vunpack.c.l.b16 %v265
  %v523 = vunpack.c.l.b16 %v266
  %v524 = vunpack.c.l.b16 %v267
  %v525 = vunpack.c.l.b16 %v268
  %v526 = vunpack.c.l.b16 %v269
  %v527 = vunpack.c.l.b16 %v270
  %v528 = vunpack.c.l.b16 %v271
  %v529 = vunpack.c.l.b16 %v272
  %v530 = vpack.c.b16 %v515, %v514
  %v531 = vpack.c.b16 %v517, %v516
  %v532 = vpack.c.b16 %v519, %v518
  %v533 = vpack.c.b16 %v521, %v520
  %v534 = vpack.c.b16 %v523, %v522
  %v535 = vpack.c.b16 %v525, %v524
  %v536 = vpack.c.b16 %v527, %v526
  %v537 = vpack.c.b16 %v529, %v528
  %546 = vmatprep.subr.bf16.mxu0 0
  %547 = vmatpush1.bf16.msra.mxu0 %v530
  %548 = vmatprep.subr.bf16.mxu0 0
  %549 = vmatpush1.bf16.msra.mxu0 %v531
  %550 = vmatprep.subr.bf16.mxu0 0
  %551 = vmatpush1.bf16.msra.mxu0 %v532
  %552 = vmatprep.subr.bf16.mxu0 0
  %553 = vmatpush1.bf16.msra.mxu0 %v533
  %554 = vmatprep.subr.bf16.mxu0 0
  %555 = vmatpush1.bf16.msra.mxu0 %v534
  %556 = vmatprep.subr.bf16.mxu0 0
  %557 = vmatpush1.bf16.msra.mxu0 %v535
  %558 = vmatprep.subr.bf16.mxu0 0
  %559 = vmatpush1.bf16.msra.mxu0 %v536
  %560 = vmatprep.subr.bf16.mxu0 0
  %561 = vmatpush1.bf16.msra.mxu0 %v537
  %562 = vmatprep.subr.bf16.mxu0 0
  %563 = vmatpush1.bf16.msra.mxu0 0
  %564 = vmatprep.subr.bf16.mxu0 0
  %565 = vmatpush1.bf16.msra.mxu0 0
  %566 = vmatprep.subr.bf16.mxu0 0
  %567 = vmatpush1.bf16.msra.mxu0 0
  %568 = vmatprep.subr.bf16.mxu0 0
  %569 = vmatpush1.bf16.msra.mxu0 0
  %570 = vmatprep.subr.bf16.mxu0 0
  %571 = vmatpush1.bf16.msra.mxu0 0
  %572 = vmatprep.subr.bf16.mxu0 0
  %573 = vmatpush1.bf16.msra.mxu0 0
  %574 = vmatprep.subr.bf16.mxu0 0
  %575 = vmatpush1.bf16.msra.mxu0 0
  %576 = vmatprep.subr.bf16.mxu0 0
  %577 = vmatpush1.bf16.msra.mxu0 0
  %578 = vmatprep.mubr.bf16.mxu0 0
  %579 = vmatmul.mubr.bf16.gmra.mrb[0].mxu0 %v249
  %v580 = vpop.f32.mrb[0].mxu0
  %v581 = vadd.f32 %v436, %v580
  %v582 = vpop.f32.mrb[0].mxu0
  %v583 = vpop.f32.mrb[0].mxu0
  %v584 = vadd.f32 %v439, %v583
  %v585 = vpop.f32.mrb[0].mxu0
  %586 = vmatprep.mubr.bf16.mxu0 0
  %587 = vmatmul.mubr.bf16.gmra.mrb[0].mxu0 %v250
  %v588 = vpop.f32.mrb[0].mxu0
  %v589 = vadd.f32 %v444, %v588
  %v590 = vpop.f32.mrb[0].mxu0
  %v591 = vpop.f32.mrb[0].mxu0
  %v592 = vadd.f32 %v447, %v591
  %v593 = vpop.f32.mrb[0].mxu0
  %594 = vmatprep.mubr.bf16.mxu0 0
  %595 = vmatmul.mubr.bf16.gmra.mrb[0].mxu0 %v251
  %v596 = vpop.f32.mrb[0].mxu0
  %v597 = vadd.f32 %v452, %v596
  %v598 = vpop.f32.mrb[0].mxu0
  %v599 = vpop.f32.mrb[0].mxu0
  %v600 = vadd.f32 %v455, %v599
  %v601 = vpop.f32.mrb[0].mxu0
  %602 = vmatprep.mubr.bf16.mxu0 0
  %603 = vmatmul.mubr.bf16.gmra.mrb[0].mxu0 %v252
  %v604 = vpop.f32.mrb[0].mxu0
  %v605 = vadd.f32 %v460, %v604
  %v606 = vpop.f32.mrb[0].mxu0
  %v607 = vpop.f32.mrb[0].mxu0
  %v608 = vadd.f32 %v463, %v607
  %v609 = vpop.f32.mrb[0].mxu0
  %610 = vmatprep.mubr.bf16.mxu0 0
  %611 = vmatmul.mubr.bf16.gmra.mrb[0].mxu0 %v253
  %v612 = vpop.f32.mrb[0].mxu0
  %v613 = vadd.f32 %v468, %v612
  %v614 = vpop.f32.mrb[0].mxu0
  %v615 = vpop.f32.mrb[0].mxu0
  %v616 = vadd.f32 %v471, %v615
  %v617 = vpop.f32.mrb[0].mxu0
  %618 = vmatprep.mubr.bf16.mxu0 0
  %619 = vmatmul.mubr.bf16.gmra.mrb[0].mxu0 %v254
  %v620 = vpop.f32.mrb[0].mxu0
  %v621 = vadd.f32 %v476, %v620
  %v622 = vpop.f32.mrb[0].mxu0
  %v623 = vpop.f32.mrb[0].mxu0
  %v624 = vadd.f32 %v479, %v623
  %v625 = vpop.f32.mrb[0].mxu0
  %626 = vmatprep.mubr.bf16.mxu0 0
  %627 = vmatmul.mubr.bf16.gmra.mrb[0].mxu0 %v255
  %v628 = vpop.f32.mrb[0].mxu0
  %v629 = vadd.f32 %v484, %v628
  %v630 = vpop.f32.mrb[0].mxu0
  %v631 = vpop.f32.mrb[0].mxu0
  %v632 = vadd.f32 %v487, %v631
  %v633 = vpop.f32.mrb[0].mxu0
  %634 = vmatprep.mubr.bf16.mxu0 0
  %635 = vmatmul.mubr.bf16.gmra.mrb[0].mxu0 %v256
  %v636 = vpop.f32.mrb[0].mxu0
  %v637 = vadd.f32 %v492, %v636
  %v638 = vpop.f32.mrb[0].mxu0
  %v639 = vpop.f32.mrb[0].mxu0
  %v640 = vadd.f32 %v495, %v639
  %v641 = vpop.f32.mrb[0].mxu0
  %642 = vdwg.mxu0
  %v643 = vld [vmem:[%s5] sm:$0x1]
  %v645 = vlaneseq
  %v646 = vshrl.u32 %v645, 7
  %v647 = vsub.s32 0, %v646
  %v648 = vrot.slane %v643, %v647
  %v650 = vadd.f32 %v581, %v648
  %v651 = vadd.f32 %v584, %v648
  %v652 = vadd.f32 %v589, %v648
  %v653 = vadd.f32 %v592, %v648
  %v654 = vadd.f32 %v597, %v648
  %v655 = vadd.f32 %v600, %v648
  %v656 = vadd.f32 %v605, %v648
  %v657 = vadd.f32 %v608, %v648
  %v658 = vadd.f32 %v613, %v648
  %v659 = vadd.f32 %v616, %v648
  %v660 = vadd.f32 %v621, %v648
  %v661 = vadd.f32 %v624, %v648
  %v662 = vadd.f32 %v629, %v648
  %v663 = vadd.f32 %v632, %v648
  %v664 = vadd.f32 %v637, %v648
  %v665 = vadd.f32 %v640, %v648
  %666 = vst [vmem:[%s6] sm:$0xff] %v650
  %667 = vst [vmem:[%s6 + $0x8] sm:$0xff] %v651
  %668 = vst [vmem:[%s6 + $0x10] sm:$0xff] %v652
  %669 = vst [vmem:[%s6 + $0x18] sm:$0xff] %v653
  %670 = vst [vmem:[%s6 + $0x20] sm:$0xff] %v654
  %671 = vst [vmem:[%s6 + $0x28] sm:$0xff] %v655
  %672 = vst [vmem:[%s6 + $0x30] sm:$0xff] %v656
  %673 = vst [vmem:[%s6 + $0x38] sm:$0xff] %v657
  %674 = vst [vmem:[%s6 + $0x40] sm:$0xff] %v658
  %675 = vst [vmem:[%s6 + $0x48] sm:$0xff] %v659
  %676 = vst [vmem:[%s6 + $0x50] sm:$0xff] %v660
  %677 = vst [vmem:[%s6 + $0x58] sm:$0xff] %v661
  %678 = vst [vmem:[%s6 + $0x60] sm:$0xff] %v662
  %679 = vst [vmem:[%s6 + $0x68] sm:$0xff] %v663
  %680 = vst [vmem:[%s6 + $0x70] sm:$0xff] %v664
  %681 = vst [vmem:[%s6 + $0x78] sm:$0xff] %v665
  // Predicated region
  $region26: #{static_graph_encoder.3} parent=0 // pred_check
    _
  $region27: #{static_graph_encoder.3} parent=0 // pred_check_branch
    %683 = sbr.rel (0) target = $region29
  $region28: #{static_graph_encoder.3} parent=0 // pred_region
    _
  $region29: #{static_graph_encoder.3} parent=0 // pred_fallthru
    _
  // Predicated region
  $region30: #{static_graph_encoder.3} parent=0 // pred_check
    _
  $region31: #{static_graph_encoder.3} parent=0 // pred_check_branch
    %685 = sbr.rel (0) target = $region33
  $region32: #{static_graph_encoder.3} parent=0 // pred_region
    _
  $region33: #{static_graph_encoder.3} parent=0 // pred_fallthru
    _

// kernel: static_graph_encoder.2
$region0: #{static_graph_encoder.2}
  #allocation0 [shape = 'u32[]', space=smem, size = 0x4, offset = 0x4, fixed_abs, tag = 'smem constant byte address 0x4 - core index']
  #allocation1 [shape = 'u32[144,128]{1,0:T(1,128)}', space=vmem, size = 0x12000, scoped, tag = 'internal scratch']
  %s0 = inlined_call_operand.vmem [shape: bf16[128,128], index: 0, kind: input, shape index: {}]
  %s1 = inlined_call_operand.vmem [shape: bf16[128,128], index: 1, kind: input, shape index: {}, may-alias: {1,2}]
  %s2 = inlined_call_operand.vmem [shape: bf16[128,128], index: 2, kind: input, shape index: {}, may-alias: {1,2}]
  %s3 = inlined_call_operand.hbm [shape: bf16[128,128], index: 3, kind: input, shape index: {}]
  %s4 = inlined_call_operand.hbm [shape: bf16[128,128], index: 4, kind: input, shape index: {}]
  %s5 = inlined_call_operand.vmem [shape: f32[1,128], index: 5, kind: input, shape index: {}]
  %s6 = inlined_call_operand.vmem [shape: bf16[128,128], index: 6, kind: output, shape index: {}]
  %s7 = sld [smem:[#allocation0]]
  $region42: #{static_graph_encoder.2} parent=0
    _
  %s9 = ssub.s32 1, %s7
  %s10 = scalar_select 0, %s9, %s7
  $region1: #{static_graph_encoder.2} parent=0
    #allocation2 [shape = 'u8[32768]{0}', space=vmem, size = 0x8000, scoped, tag = 'input window, operand 3, single buffered']
    #allocation3 [shape = 's32[1]{0}', space=sflag, size = 0x4, scoped, tag = 'scoped memory for static_graph_encoder.2']
    #allocation4 [shape = 'u8[32768]{0}', space=vmem, size = 0x8000, scoped, tag = 'input window, operand 4, single buffered']
    #allocation5 [shape = 's32[1]{0}', space=sflag, size = 0x4, scoped, tag = 'scoped memory for static_graph_encoder.2']
    %11 = vsyncpa [#allocation3], 0
    %12 = vsyncpa [#allocation5], 0
    // Predicated region
    $region2: #{static_graph_encoder.2} parent=1 // pred_check
      _
    $region3: #{static_graph_encoder.2} parent=1 // pred_check_branch
      %14 = sbr.rel (0) target = $region5
    $region4: #{static_graph_encoder.2} parent=1 // pred_region
      _
    $region5: #{static_graph_encoder.2} parent=1 // pred_fallthru
      _
    // Predicated region
    $region6: #{static_graph_encoder.2} parent=1 // pred_check
      _
    $region7: #{static_graph_encoder.2} parent=1 // pred_check_branch
      %16 = sbr.rel (0) target = $region9
    $region8: #{static_graph_encoder.2} parent=1 // pred_region
      _
    $region9: #{static_graph_encoder.2} parent=1 // pred_fallthru
      _
    // Predicated region
    $region10: #{static_graph_encoder.2} parent=1 // pred_check
      _
    $region11: #{static_graph_encoder.2} parent=1 // pred_check_branch
      %18 = sbr.rel (0) target = $region13
    $region12: #{static_graph_encoder.2} parent=1 // pred_region
      _
    $region13: #{static_graph_encoder.2} parent=1 // pred_fallthru
      _
    // Predicated region
    $region14: #{static_graph_encoder.2} parent=1 // pred_check
      _
    $region15: #{static_graph_encoder.2} parent=1 // pred_check_branch
      %20 = sbr.rel (0) target = $region17
    $region16: #{static_graph_encoder.2} parent=1 // pred_region
      %s22 = ssub.s32 1024, 1024
      %23 = vsyncadd [#allocation3], %s22
      %s24 = sshll.u32 [#allocation2], 4
      %s25 = int_to_ptr.vmem [resolvable:$true] %s24
      %30 = dma.hbm_to_vmem [thread:$0]  %s3, 1024, %s25, [#allocation3], 64, 64, 4
    $region17: #{static_graph_encoder.2} parent=1 // pred_fallthru
      _
    // Predicated region
    $region18: #{static_graph_encoder.2} parent=1 // pred_check
      _
    $region19: #{static_graph_encoder.2} parent=1 // pred_check_branch
      %32 = sbr.rel (0) target = $region21
    $region20: #{static_graph_encoder.2} parent=1 // pred_region
      %s34 = ssub.s32 1024, 1024
      %35 = vsyncadd [#allocation5], %s34
      %s36 = sshll.u32 [#allocation4], 4
      %s37 = int_to_ptr.vmem [resolvable:$true] %s36
      %42 = dma.hbm_to_vmem [thread:$0]  %s4, 1024, %s37, [#allocation5], 64, 64, 4
    $region21: #{static_graph_encoder.2} parent=1 // pred_fallthru
      _
    // Predicated region
    $region22: #{static_graph_encoder.2} parent=1 // pred_check
      _
    $region23: #{static_graph_encoder.2} parent=1 // pred_check_branch
      %44 = sbr.rel (0) target = $region25
    $region24: #{static_graph_encoder.2} parent=1 // pred_region
      _
    $region25: #{static_graph_encoder.2} parent=1 // pred_fallthru
      _
    // Predicated region
    $region26: #{static_graph_encoder.2} parent=1 // pred_check
      _
    $region27: #{static_graph_encoder.2} parent=1 // pred_check_branch
      %46 = sbr.rel (0) target = $region29
    $region28: #{static_graph_encoder.2} parent=1 // pred_region
      %47 = dma.done [#allocation3], 1024
    $region29: #{static_graph_encoder.2} parent=1 // pred_fallthru
      _
    // Predicated region
    $region30: #{static_graph_encoder.2} parent=1 // pred_check
      _
    $region31: #{static_graph_encoder.2} parent=1 // pred_check_branch
      %49 = sbr.rel (0) target = $region33
    $region32: #{static_graph_encoder.2} parent=1 // pred_region
      %50 = dma.done [#allocation5], 1024
    $region33: #{static_graph_encoder.2} parent=1 // pred_fallthru
      _
    %v52 = vld [vmem:[%s0] sm:$0xf]
    %v53 = vld [vmem:[%s0 + $0x4] sm:$0xf]
    %v54 = vld [vmem:[%s0 + $0x8] sm:$0xf]
    %v55 = vld [vmem:[%s0 + $0xc] sm:$0xf]
    %v56 = vld [vmem:[%s0 + $0x10] sm:$0xf]
    %v57 = vld [vmem:[%s0 + $0x14] sm:$0xf]
    %v58 = vld [vmem:[%s0 + $0x18] sm:$0xf]
    %v59 = vld [vmem:[%s0 + $0x1c] sm:$0xf]
    %v60 = vld [vmem:[%s0 + $0x20] sm:$0xf]
    %v61 = vld [vmem:[%s0 + $0x24] sm:$0xf]
    %v62 = vld [vmem:[%s0 + $0x28] sm:$0xf]
    %v63 = vld [vmem:[%s0 + $0x2c] sm:$0xf]
    %v64 = vld [vmem:[%s0 + $0x30] sm:$0xf]
    %v65 = vld [vmem:[%s0 + $0x34] sm:$0xf]
    %v66 = vld [vmem:[%s0 + $0x38] sm:$0xf]
    %v67 = vld [vmem:[%s0 + $0x3c] sm:$0xf]
    %v68 = vld [vmem:[%s1] sm:$0xf]
    %v69 = vld [vmem:[%s1 + $0x4] sm:$0xf]
    %v70 = vld [vmem:[%s1 + $0x8] sm:$0xf]
    %v71 = vld [vmem:[%s1 + $0xc] sm:$0xf]
    %v72 = vld [vmem:[%s1 + $0x10] sm:$0xf]
    %v73 = vld [vmem:[%s1 + $0x14] sm:$0xf]
    %v74 = vld [vmem:[%s1 + $0x18] sm:$0xf]
    %v75 = vld [vmem:[%s1 + $0x1c] sm:$0xf]
    %v76 = vld [vmem:[%s1 + $0x20] sm:$0xf]
    %v77 = vld [vmem:[%s1 + $0x24] sm:$0xf]
    %v78 = vld [vmem:[%s1 + $0x28] sm:$0xf]
    %v79 = vld [vmem:[%s1 + $0x2c] sm:$0xf]
    %v80 = vld [vmem:[%s1 + $0x30] sm:$0xf]
    %v81 = vld [vmem:[%s1 + $0x34] sm:$0xf]
    %v82 = vld [vmem:[%s1 + $0x38] sm:$0xf]
    %v83 = vld [vmem:[%s1 + $0x3c] sm:$0xf]
    %v100 = vunpack.c.l.b16 %v52
    %v101 = vunpack.c.l.b16 %v53
    %v102 = vunpack.c.l.b16 %v54
    %v103 = vunpack.c.l.b16 %v55
    %v104 = vunpack.c.l.b16 %v56
    %v105 = vunpack.c.l.b16 %v57
    %v106 = vunpack.c.l.b16 %v58
    %v107 = vunpack.c.l.b16 %v59
    %v108 = vunpack.c.l.b16 %v60
    %v109 = vunpack.c.l.b16 %v61
    %v110 = vunpack.c.l.b16 %v62
    %v111 = vunpack.c.l.b16 %v63
    %v112 = vunpack.c.l.b16 %v64
    %v113 = vunpack.c.l.b16 %v65
    %v114 = vunpack.c.l.b16 %v66
    %v115 = vunpack.c.l.b16 %v67
    %v116 = vpack.c.b16 %v101, %v100
    %v117 = vpack.c.b16 %v103, %v102
    %v118 = vpack.c.b16 %v105, %v104
    %v119 = vpack.c.b16 %v107, %v106
    %v120 = vpack.c.b16 %v109, %v108
    %v121 = vpack.c.b16 %v111, %v110
    %v122 = vpack.c.b16 %v113, %v112
    %v123 = vpack.c.b16 %v115, %v114
    %v148 = vunpack.c.l.b16 %v68
    %v149 = vunpack.c.l.b16 %v69
    %v150 = vunpack.c.l.b16 %v70
    %v151 = vunpack.c.l.b16 %v71
    %v152 = vunpack.c.l.b16 %v72
    %v153 = vunpack.c.l.b16 %v73
    %v154 = vunpack.c.l.b16 %v74
    %v155 = vunpack.c.l.b16 %v75
    %v156 = vunpack.c.l.b16 %v76
    %v157 = vunpack.c.l.b16 %v77
    %v158 = vunpack.c.l.b16 %v78
    %v159 = vunpack.c.l.b16 %v79
    %v160 = vunpack.c.l.b16 %v80
    %v161 = vunpack.c.l.b16 %v81
    %v162 = vunpack.c.l.b16 %v82
    %v163 = vunpack.c.l.b16 %v83
    %v164 = vpack.c.b16 %v149, %v148
    %v165 = vpack.c.b16 %v151, %v150
    %v166 = vpack.c.b16 %v153, %v152
    %v167 = vpack.c.b16 %v155, %v154
    %v168 = vpack.c.b16 %v157, %v156
    %v169 = vpack.c.b16 %v159, %v158
    %v170 = vpack.c.b16 %v161, %v160
    %v171 = vpack.c.b16 %v163, %v162
    %180 = vmatprep.subr.bf16.mxu0 0
    %181 = vmatpush1.bf16.msra.mxu0 %v164
    %182 = vmatprep.subr.bf16.mxu0 0
    %183 = vmatpush1.bf16.msra.mxu0 %v165
    %184 = vmatprep.subr.bf16.mxu0 0
    %185 = vmatpush1.bf16.msra.mxu0 %v166
    %186 = vmatprep.subr.bf16.mxu0 0
    %187 = vmatpush1.bf16.msra.mxu0 %v167
    %188 = vmatprep.subr.bf16.mxu0 0
    %189 = vmatpush1.bf16.msra.mxu0 %v168
    %190 = vmatprep.subr.bf16.mxu0 0
    %191 = vmatpush1.bf16.msra.mxu0 %v169
    %192 = vmatprep.subr.bf16.mxu0 0
    %193 = vmatpush1.bf16.msra.mxu0 %v170
    %194 = vmatprep.subr.bf16.mxu0 0
    %195 = vmatpush1.bf16.msra.mxu0 %v171
    %196 = vmatprep.subr.bf16.mxu0 0
    %197 = vmatpush1.bf16.msra.mxu0 0
    %198 = vmatprep.subr.bf16.mxu0 0
    %199 = vmatpush1.bf16.msra.mxu0 0
    %200 = vmatprep.subr.bf16.mxu0 0
    %201 = vmatpush1.bf16.msra.mxu0 0
    %202 = vmatprep.subr.bf16.mxu0 0
    %203 = vmatpush1.bf16.msra.mxu0 0
    %204 = vmatprep.subr.bf16.mxu0 0
    %205 = vmatpush1.bf16.msra.mxu0 0
    %206 = vmatprep.subr.bf16.mxu0 0
    %207 = vmatpush1.bf16.msra.mxu0 0
    %208 = vmatprep.subr.bf16.mxu0 0
    %209 = vmatpush1.bf16.msra.mxu0 0
    %210 = vmatprep.subr.bf16.mxu0 0
    %211 = vmatpush1.bf16.msra.mxu0 0
    %212 = vmatprep.mubr.bf16.mxu0 0
    %213 = vmatmul.mubr.bf16.gmra.mrb[0].mxu0 %v116
    %v214 = vpop.f32.mrb[0].mxu0
    %v215 = vadd.f32 0.0, %v214
    %v216 = vpop.f32.mrb[0].mxu0
    %v217 = vpop.f32.mrb[0].mxu0
    %v218 = vadd.f32 0.0, %v217
    %v219 = vpop.f32.mrb[0].mxu0
    %220 = vmatprep.mubr.bf16.mxu0 0
    %221 = vmatmul.mubr.bf16.gmra.mrb[0].mxu0 %v117
    %v222 = vpop.f32.mrb[0].mxu0
    %v223 = vadd.f32 0.0, %v222
    %v224 = vpop.f32.mrb[0].mxu0
    %v225 = vpop.f32.mrb[0].mxu0
    %v226 = vadd.f32 0.0, %v225
    %v227 = vpop.f32.mrb[0].mxu0
    %228 = vmatprep.mubr.bf16.mxu0 0
    %229 = vmatmul.mubr.bf16.gmra.mrb[0].mxu0 %v118
    %v230 = vpop.f32.mrb[0].mxu0
    %v231 = vadd.f32 0.0, %v230
    %v232 = vpop.f32.mrb[0].mxu0
    %v233 = vpop.f32.mrb[0].mxu0
    %v234 = vadd.f32 0.0, %v233
    %v235 = vpop.f32.mrb[0].mxu0
    %236 = vmatprep.mubr.bf16.mxu0 0
    %237 = vmatmul.mubr.bf16.gmra.mrb[0].mxu0 %v119
    %v238 = vpop.f32.mrb[0].mxu0
    %v239 = vadd.f32 0.0, %v238
    %v240 = vpop.f32.mrb[0].mxu0
    %v241 = vpop.f32.mrb[0].mxu0
    %v242 = vadd.f32 0.0, %v241
    %v243 = vpop.f32.mrb[0].mxu0
    %244 = vmatprep.mubr.bf16.mxu0 0
    %245 = vmatmul.mubr.bf16.gmra.mrb[0].mxu0 %v120
    %v246 = vpop.f32.mrb[0].mxu0
    %v247 = vadd.f32 0.0, %v246
    %v248 = vpop.f32.mrb[0].mxu0
    %v249 = vpop.f32.mrb[0].mxu0
    %v250 = vadd.f32 0.0, %v249
    %v251 = vpop.f32.mrb[0].mxu0
    %252 = vmatprep.mubr.bf16.mxu0 0
    %253 = vmatmul.mubr.bf16.gmra.mrb[0].mxu0 %v121
    %v254 = vpop.f32.mrb[0].mxu0
    %v255 = vadd.f32 0.0, %v254
    %v256 = vpop.f32.mrb[0].mxu0
    %v257 = vpop.f32.mrb[0].mxu0
    %v258 = vadd.f32 0.0, %v257
    %v259 = vpop.f32.mrb[0].mxu0
    %260 = vmatprep.mubr.bf16.mxu0 0
    %261 = vmatmul.mubr.bf16.gmra.mrb[0].mxu0 %v122
    %v262 = vpop.f32.mrb[0].mxu0
    %v263 = vadd.f32 0.0, %v262
    %v264 = vpop.f32.mrb[0].mxu0
    %v265 = vpop.f32.mrb[0].mxu0
    %v266 = vadd.f32 0.0, %v265
    %v267 = vpop.f32.mrb[0].mxu0
    %268 = vmatprep.mubr.bf16.mxu0 0
    %269 = vmatmul.mubr.bf16.gmra.mrb[0].mxu0 %v123
    %v270 = vpop.f32.mrb[0].mxu0
    %v271 = vadd.f32 0.0, %v270
    %v272 = vpop.f32.mrb[0].mxu0
    %v273 = vpop.f32.mrb[0].mxu0
    %v274 = vadd.f32 0.0, %v273
    %v275 = vpop.f32.mrb[0].mxu0
    %276 = vdwg.mxu0
    %v277 = vpack.c.bf16 %v218, %v215
    %v278 = vpack.c.bf16 %v226, %v223
    %v279 = vpack.c.bf16 %v234, %v231
    %v280 = vpack.c.bf16 %v242, %v239
    %v281 = vpack.c.bf16 %v250, %v247
    %v282 = vpack.c.bf16 %v258, %v255
    %v283 = vpack.c.bf16 %v266, %v263
    %v284 = vpack.c.bf16 %v274, %v271
    %v285 = vld [vmem:[#allocation2] sm:$0xf]
    %v286 = vld [vmem:[#allocation2 + $0x4] sm:$0xf]
    %v287 = vld [vmem:[#allocation2 + $0x8] sm:$0xf]
    %v288 = vld [vmem:[#allocation2 + $0xc] sm:$0xf]
    %v289 = vld [vmem:[#allocation2 + $0x10] sm:$0xf]
    %v290 = vld [vmem:[#allocation2 + $0x14] sm:$0xf]
    %v291 = vld [vmem:[#allocation2 + $0x18] sm:$0xf]
    %v292 = vld [vmem:[#allocation2 + $0x1c] sm:$0xf]
    %v293 = vld [vmem:[#allocation2 + $0x20] sm:$0xf]
    %v294 = vld [vmem:[#allocation2 + $0x24] sm:$0xf]
    %v295 = vld [vmem:[#allocation2 + $0x28] sm:$0xf]
    %v296 = vld [vmem:[#allocation2 + $0x2c] sm:$0xf]
    %v297 = vld [vmem:[#allocation2 + $0x30] sm:$0xf]
    %v298 = vld [vmem:[#allocation2 + $0x34] sm:$0xf]
    %v299 = vld [vmem:[#allocation2 + $0x38] sm:$0xf]
    %v300 = vld [vmem:[#allocation2 + $0x3c] sm:$0xf]
    %v301 = vld [vmem:[%s2] sm:$0xf]
    %v302 = vld [vmem:[%s2 + $0x4] sm:$0xf]
    %v303 = vld [vmem:[%s2 + $0x8] sm:$0xf]
    %v304 = vld [vmem:[%s2 + $0xc] sm:$0xf]
    %v305 = vld [vmem:[%s2 + $0x10] sm:$0xf]
    %v306 = vld [vmem:[%s2 + $0x14] sm:$0xf]
    %v307 = vld [vmem:[%s2 + $0x18] sm:$0xf]
    %v308 = vld [vmem:[%s2 + $0x1c] sm:$0xf]
    %v309 = vld [vmem:[%s2 + $0x20] sm:$0xf]
    %v310 = vld [vmem:[%s2 + $0x24] sm:$0xf]
    %v311 = vld [vmem:[%s2 + $0x28] sm:$0xf]
    %v312 = vld [vmem:[%s2 + $0x2c] sm:$0xf]
    %v313 = vld [vmem:[%s2 + $0x30] sm:$0xf]
    %v314 = vld [vmem:[%s2 + $0x34] sm:$0xf]
    %v315 = vld [vmem:[%s2 + $0x38] sm:$0xf]
    %v316 = vld [vmem:[%s2 + $0x3c] sm:$0xf]
    %v317 = vld [vmem:[#allocation4] sm:$0xf]
    %v318 = vld [vmem:[#allocation4 + $0x4] sm:$0xf]
    %v319 = vld [vmem:[#allocation4 + $0x8] sm:$0xf]
    %v320 = vld [vmem:[#allocation4 + $0xc] sm:$0xf]
    %v321 = vld [vmem:[#allocation4 + $0x10] sm:$0xf]
    %v322 = vld [vmem:[#allocation4 + $0x14] sm:$0xf]
    %v323 = vld [vmem:[#allocation4 + $0x18] sm:$0xf]
    %v324 = vld [vmem:[#allocation4 + $0x1c] sm:$0xf]
    %v325 = vld [vmem:[#allocation4 + $0x20] sm:$0xf]
    %v326 = vld [vmem:[#allocation4 + $0x24] sm:$0xf]
    %v327 = vld [vmem:[#allocation4 + $0x28] sm:$0xf]
    %v328 = vld [vmem:[#allocation4 + $0x2c] sm:$0xf]
    %v329 = vld [vmem:[#allocation4 + $0x30] sm:$0xf]
    %v330 = vld [vmem:[#allocation4 + $0x34] sm:$0xf]
    %v331 = vld [vmem:[#allocation4 + $0x38] sm:$0xf]
    %v332 = vld [vmem:[#allocation4 + $0x3c] sm:$0xf]
    %v349 = vunpack.c.l.b16 %v301
    %v350 = vunpack.c.l.b16 %v302
    %v351 = vunpack.c.l.b16 %v303
    %v352 = vunpack.c.l.b16 %v304
    %v353 = vunpack.c.l.b16 %v305
    %v354 = vunpack.c.l.b16 %v306
    %v355 = vunpack.c.l.b16 %v307
    %v356 = vunpack.c.l.b16 %v308
    %v357 = vunpack.c.l.b16 %v309
    %v358 = vunpack.c.l.b16 %v310
    %v359 = vunpack.c.l.b16 %v311
    %v360 = vunpack.c.l.b16 %v312
    %v361 = vunpack.c.l.b16 %v313
    %v362 = vunpack.c.l.b16 %v314
    %v363 = vunpack.c.l.b16 %v315
    %v364 = vunpack.c.l.b16 %v316
    %v365 = vpack.c.b16 %v350, %v349
    %v366 = vpack.c.b16 %v352, %v351
    %v367 = vpack.c.b16 %v354, %v353
    %v368 = vpack.c.b16 %v356, %v355
    %v369 = vpack.c.b16 %v358, %v357
    %v370 = vpack.c.b16 %v360, %v359
    %v371 = vpack.c.b16 %v362, %v361
    %v372 = vpack.c.b16 %v364, %v363
    %v397 = vunpack.c.l.b16 %v317
    %v398 = vunpack.c.l.b16 %v318
    %v399 = vunpack.c.l.b16 %v319
    %v400 = vunpack.c.l.b16 %v320
    %v401 = vunpack.c.l.b16 %v321
    %v402 = vunpack.c.l.b16 %v322
    %v403 = vunpack.c.l.b16 %v323
    %v404 = vunpack.c.l.b16 %v324
    %v405 = vunpack.c.l.b16 %v325
    %v406 = vunpack.c.l.b16 %v326
    %v407 = vunpack.c.l.b16 %v327
    %v408 = vunpack.c.l.b16 %v328
    %v409 = vunpack.c.l.b16 %v329
    %v410 = vunpack.c.l.b16 %v330
    %v411 = vunpack.c.l.b16 %v331
    %v412 = vunpack.c.l.b16 %v332
    %v413 = vpack.c.b16 %v398, %v397
    %v414 = vpack.c.b16 %v400, %v399
    %v415 = vpack.c.b16 %v402, %v401
    %v416 = vpack.c.b16 %v404, %v403
    %v417 = vpack.c.b16 %v406, %v405
    %v418 = vpack.c.b16 %v408, %v407
    %v419 = vpack.c.b16 %v410, %v409
    %v420 = vpack.c.b16 %v412, %v411
    %429 = vmatprep.subr.bf16.mxu0 0
    %430 = vmatpush1.bf16.msra.mxu0 %v413
    %431 = vmatprep.subr.bf16.mxu0 0
    %432 = vmatpush1.bf16.msra.mxu0 %v414
    %433 = vmatprep.subr.bf16.mxu0 0
    %434 = vmatpush1.bf16.msra.mxu0 %v415
    %435 = vmatprep.subr.bf16.mxu0 0
    %436 = vmatpush1.bf16.msra.mxu0 %v416
    %437 = vmatprep.subr.bf16.mxu0 0
    %438 = vmatpush1.bf16.msra.mxu0 %v417
    %439 = vmatprep.subr.bf16.mxu0 0
    %440 = vmatpush1.bf16.msra.mxu0 %v418
    %441 = vmatprep.subr.bf16.mxu0 0
    %442 = vmatpush1.bf16.msra.mxu0 %v419
    %443 = vmatprep.subr.bf16.mxu0 0
    %444 = vmatpush1.bf16.msra.mxu0 %v420
    %445 = vmatprep.subr.bf16.mxu0 0
    %446 = vmatpush1.bf16.msra.mxu0 0
    %447 = vmatprep.subr.bf16.mxu0 0
    %448 = vmatpush1.bf16.msra.mxu0 0
    %449 = vmatprep.subr.bf16.mxu0 0
    %450 = vmatpush1.bf16.msra.mxu0 0
    %451 = vmatprep.subr.bf16.mxu0 0
    %452 = vmatpush1.bf16.msra.mxu0 0
    %453 = vmatprep.subr.bf16.mxu0 0
    %454 = vmatpush1.bf16.msra.mxu0 0
    %455 = vmatprep.subr.bf16.mxu0 0
    %456 = vmatpush1.bf16.msra.mxu0 0
    %457 = vmatprep.subr.bf16.mxu0 0
    %458 = vmatpush1.bf16.msra.mxu0 0
    %459 = vmatprep.subr.bf16.mxu0 0
    %460 = vmatpush1.bf16.msra.mxu0 0
    %461 = vmatprep.mubr.bf16.mxu0 0
    %462 = vmatmul.mubr.bf16.gmra.mrb[0].mxu0 %v365
    %v463 = vpop.f32.mrb[0].mxu0
    %v464 = vadd.f32 0.0, %v463
    %v465 = vpop.f32.mrb[0].mxu0
    %v466 = vpop.f32.mrb[0].mxu0
    %v467 = vadd.f32 0.0, %v466
    %v468 = vpop.f32.mrb[0].mxu0
    %469 = vmatprep.mubr.bf16.mxu0 0
    %470 = vmatmul.mubr.bf16.gmra.mrb[0].mxu0 %v366
    %v471 = vpop.f32.mrb[0].mxu0
    %v472 = vadd.f32 0.0, %v471
    %v473 = vpop.f32.mrb[0].mxu0
    %v474 = vpop.f32.mrb[0].mxu0
    %v475 = vadd.f32 0.0, %v474
    %v476 = vpop.f32.mrb[0].mxu0
    %477 = vmatprep.mubr.bf16.mxu0 0
    %478 = vmatmul.mubr.bf16.gmra.mrb[0].mxu0 %v367
    %v479 = vpop.f32.mrb[0].mxu0
    %v480 = vadd.f32 0.0, %v479
    %v481 = vpop.f32.mrb[0].mxu0
    %v482 = vpop.f32.mrb[0].mxu0
    %v483 = vadd.f32 0.0, %v482
    %v484 = vpop.f32.mrb[0].mxu0
    %485 = vmatprep.mubr.bf16.mxu0 0
    %486 = vmatmul.mubr.bf16.gmra.mrb[0].mxu0 %v368
    %v487 = vpop.f32.mrb[0].mxu0
    %v488 = vadd.f32 0.0, %v487
    %v489 = vpop.f32.mrb[0].mxu0
    %v490 = vpop.f32.mrb[0].mxu0
    %v491 = vadd.f32 0.0, %v490
    %v492 = vpop.f32.mrb[0].mxu0
    %493 = vmatprep.mubr.bf16.mxu0 0
    %494 = vmatmul.mubr.bf16.gmra.mrb[0].mxu0 %v369
    %v495 = vpop.f32.mrb[0].mxu0
    %v496 = vadd.f32 0.0, %v495
    %v497 = vpop.f32.mrb[0].mxu0
    %v498 = vpop.f32.mrb[0].mxu0
    %v499 = vadd.f32 0.0, %v498
    %v500 = vpop.f32.mrb[0].mxu0
    %501 = vmatprep.mubr.bf16.mxu0 0
    %502 = vmatmul.mubr.bf16.gmra.mrb[0].mxu0 %v370
    %v503 = vpop.f32.mrb[0].mxu0
    %v504 = vadd.f32 0.0, %v503
    %v505 = vpop.f32.mrb[0].mxu0
    %v506 = vpop.f32.mrb[0].mxu0
    %v507 = vadd.f32 0.0, %v506
    %v508 = vpop.f32.mrb[0].mxu0
    %509 = vmatprep.mubr.bf16.mxu0 0
    %510 = vmatmul.mubr.bf16.gmra.mrb[0].mxu0 %v371
    %v511 = vpop.f32.mrb[0].mxu0
    %v512 = vadd.f32 0.0, %v511
    %v513 = vpop.f32.mrb[0].mxu0
    %v514 = vpop.f32.mrb[0].mxu0
    %v515 = vadd.f32 0.0, %v514
    %v516 = vpop.f32.mrb[0].mxu0
    %517 = vmatprep.mubr.bf16.mxu0 0
    %518 = vmatmul.mubr.bf16.gmra.mrb[0].mxu0 %v372
    %v519 = vpop.f32.mrb[0].mxu0
    %v520 = vadd.f32 0.0, %v519
    %v521 = vpop.f32.mrb[0].mxu0
    %v522 = vpop.f32.mrb[0].mxu0
    %v523 = vadd.f32 0.0, %v522
    %v524 = vpop.f32.mrb[0].mxu0
    %525 = vdwg.mxu0
    %v542 = vunpack.c.l.b16 %v285
    %v543 = vunpack.c.l.b16 %v286
    %v544 = vunpack.c.l.b16 %v287
    %v545 = vunpack.c.l.b16 %v288
    %v546 = vunpack.c.l.b16 %v289
    %v547 = vunpack.c.l.b16 %v290
    %v548 = vunpack.c.l.b16 %v291
    %v549 = vunpack.c.l.b16 %v292
    %v550 = vunpack.c.l.b16 %v293
    %v551 = vunpack.c.l.b16 %v294
    %v552 = vunpack.c.l.b16 %v295
    %v553 = vunpack.c.l.b16 %v296
    %v554 = vunpack.c.l.b16 %v297
    %v555 = vunpack.c.l.b16 %v298
    %v556 = vunpack.c.l.b16 %v299
    %v557 = vunpack.c.l.b16 %v300
    %v558 = vpack.c.b16 %v543, %v542
    %v559 = vpack.c.b16 %v545, %v544
    %v560 = vpack.c.b16 %v547, %v546
    %v561 = vpack.c.b16 %v549, %v548
    %v562 = vpack.c.b16 %v551, %v550
    %v563 = vpack.c.b16 %v553, %v552
    %v564 = vpack.c.b16 %v555, %v554
    %v565 = vpack.c.b16 %v557, %v556
    %574 = vmatprep.subr.bf16.mxu0 0
    %575 = vmatpush1.bf16.msra.mxu0 %v558
    %576 = vmatprep.subr.bf16.mxu0 0
    %577 = vmatpush1.bf16.msra.mxu0 %v559
    %578 = vmatprep.subr.bf16.mxu0 0
    %579 = vmatpush1.bf16.msra.mxu0 %v560
    %580 = vmatprep.subr.bf16.mxu0 0
    %581 = vmatpush1.bf16.msra.mxu0 %v561
    %582 = vmatprep.subr.bf16.mxu0 0
    %583 = vmatpush1.bf16.msra.mxu0 %v562
    %584 = vmatprep.subr.bf16.mxu0 0
    %585 = vmatpush1.bf16.msra.mxu0 %v563
    %586 = vmatprep.subr.bf16.mxu0 0
    %587 = vmatpush1.bf16.msra.mxu0 %v564
    %588 = vmatprep.subr.bf16.mxu0 0
    %589 = vmatpush1.bf16.msra.mxu0 %v565
    %590 = vmatprep.subr.bf16.mxu0 0
    %591 = vmatpush1.bf16.msra.mxu0 0
    %592 = vmatprep.subr.bf16.mxu0 0
    %593 = vmatpush1.bf16.msra.mxu0 0
    %594 = vmatprep.subr.bf16.mxu0 0
    %595 = vmatpush1.bf16.msra.mxu0 0
    %596 = vmatprep.subr.bf16.mxu0 0
    %597 = vmatpush1.bf16.msra.mxu0 0
    %598 = vmatprep.subr.bf16.mxu0 0
    %599 = vmatpush1.bf16.msra.mxu0 0
    %600 = vmatprep.subr.bf16.mxu0 0
    %601 = vmatpush1.bf16.msra.mxu0 0
    %602 = vmatprep.subr.bf16.mxu0 0
    %603 = vmatpush1.bf16.msra.mxu0 0
    %604 = vmatprep.subr.bf16.mxu0 0
    %605 = vmatpush1.bf16.msra.mxu0 0
    %606 = vmatprep.mubr.bf16.mxu0 0
    %607 = vmatmul.mubr.bf16.gmra.mrb[0].mxu0 %v277
    %v608 = vpop.f32.mrb[0].mxu0
    %v609 = vadd.f32 %v464, %v608
    %v610 = vpop.f32.mrb[0].mxu0
    %v611 = vpop.f32.mrb[0].mxu0
    %v612 = vadd.f32 %v467, %v611
    %v613 = vpop.f32.mrb[0].mxu0
    %614 = vmatprep.mubr.bf16.mxu0 0
    %615 = vmatmul.mubr.bf16.gmra.mrb[0].mxu0 %v278
    %v616 = vpop.f32.mrb[0].mxu0
    %v617 = vadd.f32 %v472, %v616
    %v618 = vpop.f32.mrb[0].mxu0
    %v619 = vpop.f32.mrb[0].mxu0
    %v620 = vadd.f32 %v475, %v619
    %v621 = vpop.f32.mrb[0].mxu0
    %622 = vmatprep.mubr.bf16.mxu0 0
    %623 = vmatmul.mubr.bf16.gmra.mrb[0].mxu0 %v279
    %v624 = vpop.f32.mrb[0].mxu0
    %v625 = vadd.f32 %v480, %v624
    %v626 = vpop.f32.mrb[0].mxu0
    %v627 = vpop.f32.mrb[0].mxu0
    %v628 = vadd.f32 %v483, %v627
    %v629 = vpop.f32.mrb[0].mxu0
    %630 = vmatprep.mubr.bf16.mxu0 0
    %631 = vmatmul.mubr.bf16.gmra.mrb[0].mxu0 %v280
    %v632 = vpop.f32.mrb[0].mxu0
    %v633 = vadd.f32 %v488, %v632
    %v634 = vpop.f32.mrb[0].mxu0
    %v635 = vpop.f32.mrb[0].mxu0
    %v636 = vadd.f32 %v491, %v635
    %v637 = vpop.f32.mrb[0].mxu0
    %638 = vmatprep.mubr.bf16.mxu0 0
    %639 = vmatmul.mubr.bf16.gmra.mrb[0].mxu0 %v281
    %v640 = vpop.f32.mrb[0].mxu0
    %v641 = vadd.f32 %v496, %v640
    %v642 = vpop.f32.mrb[0].mxu0
    %v643 = vpop.f32.mrb[0].mxu0
    %v644 = vadd.f32 %v499, %v643
    %v645 = vpop.f32.mrb[0].mxu0
    %646 = vmatprep.mubr.bf16.mxu0 0
    %647 = vmatmul.mubr.bf16.gmra.mrb[0].mxu0 %v282
    %v648 = vpop.f32.mrb[0].mxu0
    %v649 = vadd.f32 %v504, %v648
    %v650 = vpop.f32.mrb[0].mxu0
    %v651 = vpop.f32.mrb[0].mxu0
    %v652 = vadd.f32 %v507, %v651
    %v653 = vpop.f32.mrb[0].mxu0
    %654 = vmatprep.mubr.bf16.mxu0 0
    %655 = vmatmul.mubr.bf16.gmra.mrb[0].mxu0 %v283
    %v656 = vpop.f32.mrb[0].mxu0
    %v657 = vadd.f32 %v512, %v656
    %v658 = vpop.f32.mrb[0].mxu0
    %v659 = vpop.f32.mrb[0].mxu0
    %v660 = vadd.f32 %v515, %v659
    %v661 = vpop.f32.mrb[0].mxu0
    %662 = vmatprep.mubr.bf16.mxu0 0
    %663 = vmatmul.mubr.bf16.gmra.mrb[0].mxu0 %v284
    %v664 = vpop.f32.mrb[0].mxu0
    %v665 = vadd.f32 %v520, %v664
    %v666 = vpop.f32.mrb[0].mxu0
    %v667 = vpop.f32.mrb[0].mxu0
    %v668 = vadd.f32 %v523, %v667
    %v669 = vpop.f32.mrb[0].mxu0
    %670 = vdwg.mxu0
    %v671 = vld [vmem:[%s5] sm:$0x1]
    %v673 = vlaneseq
    %v674 = vshrl.u32 %v673, 7
    %v675 = vsub.s32 0, %v674
    %v676 = vrot.slane %v671, %v675
    %v678 = vadd.f32 %v609, %v676
    %v679 = vadd.f32 %v612, %v676
    %v680 = vadd.f32 %v617, %v676
    %v681 = vadd.f32 %v620, %v676
    %v682 = vadd.f32 %v625, %v676
    %v683 = vadd.f32 %v628, %v676
    %v684 = vadd.f32 %v633, %v676
    %v685 = vadd.f32 %v636, %v676
    %v686 = vadd.f32 %v641, %v676
    %v687 = vadd.f32 %v644, %v676
    %v688 = vadd.f32 %v649, %v676
    %v689 = vadd.f32 %v652, %v676
    %v690 = vadd.f32 %v657, %v676
    %v691 = vadd.f32 %v660, %v676
    %v692 = vadd.f32 %v665, %v676
    %v693 = vadd.f32 %v668, %v676
    %v694 = vmax.f32 %v678, 0.0
    %v695 = vmax.f32 %v679, 0.0
    %v696 = vmax.f32 %v680, 0.0
    %v697 = vmax.f32 %v681, 0.0
    %v698 = vmax.f32 %v682, 0.0
    %v699 = vmax.f32 %v683, 0.0
    %v700 = vmax.f32 %v684, 0.0
    %v701 = vmax.f32 %v685, 0.0
    %v702 = vmax.f32 %v686, 0.0
    %v703 = vmax.f32 %v687, 0.0
    %v704 = vmax.f32 %v688, 0.0
    %v705 = vmax.f32 %v689, 0.0
    %v706 = vmax.f32 %v690, 0.0
    %v707 = vmax.f32 %v691, 0.0
    %v708 = vmax.f32 %v692, 0.0
    %v709 = vmax.f32 %v693, 0.0
    %v710 = vpack.c.bf16 %v695, %v694
    %v711 = vpack.c.bf16 %v697, %v696
    %v712 = vpack.c.bf16 %v699, %v698
    %v713 = vpack.c.bf16 %v701, %v700
    %v714 = vpack.c.bf16 %v703, %v702
    %v715 = vpack.c.bf16 %v705, %v704
    %v716 = vpack.c.bf16 %v707, %v706
    %v717 = vpack.c.bf16 %v709, %v708
    %v726 = vunpack.c.l.b16 %v710
    %v727 = vunpack.c.h.b16 %v710
    %v728 = vunpack.c.l.b16 %v711
    %v729 = vunpack.c.h.b16 %v711
    %v730 = vunpack.c.l.b16 %v712
    %v731 = vunpack.c.h.b16 %v712
    %v732 = vunpack.c.l.b16 %v713
    %v733 = vunpack.c.h.b16 %v713
    %v734 = vunpack.c.l.b16 %v714
    %v735 = vunpack.c.h.b16 %v714
    %v736 = vunpack.c.l.b16 %v715
    %v737 = vunpack.c.h.b16 %v715
    %v738 = vunpack.c.l.b16 %v716
    %v739 = vunpack.c.h.b16 %v716
    %v740 = vunpack.c.l.b16 %v717
    %v741 = vunpack.c.h.b16 %v717
    %v742 = vpack.c.b16 %v726, %v726
    %v743 = vpack.c.b16 %v727, %v727
    %v744 = vpack.c.b16 %v728, %v728
    %v745 = vpack.c.b16 %v729, %v729
    %v746 = vpack.c.b16 %v730, %v730
    %v747 = vpack.c.b16 %v731, %v731
    %v748 = vpack.c.b16 %v732, %v732
    %v749 = vpack.c.b16 %v733, %v733
    %v750 = vpack.c.b16 %v734, %v734
    %v751 = vpack.c.b16 %v735, %v735
    %v752 = vpack.c.b16 %v736, %v736
    %v753 = vpack.c.b16 %v737, %v737
    %v754 = vpack.c.b16 %v738, %v738
    %v755 = vpack.c.b16 %v739, %v739
    %v756 = vpack.c.b16 %v740, %v740
    %v757 = vpack.c.b16 %v741, %v741
    %774 = vst [vmem:[%s6] sm:$0xf] %v742
    %775 = vst [vmem:[%s6 + $0x4] sm:$0xf] %v743
    %776 = vst [vmem:[%s6 + $0x8] sm:$0xf] %v744
    %777 = vst [vmem:[%s6 + $0xc] sm:$0xf] %v745
    %778 = vst [vmem:[%s6 + $0x10] sm:$0xf] %v746
    %779 = vst [vmem:[%s6 + $0x14] sm:$0xf] %v747
    %780 = vst [vmem:[%s6 + $0x18] sm:$0xf] %v748
    %781 = vst [vmem:[%s6 + $0x1c] sm:$0xf] %v749
    %782 = vst [vmem:[%s6 + $0x20] sm:$0xf] %v750
    %783 = vst [vmem:[%s6 + $0x24] sm:$0xf] %v751
    %784 = vst [vmem:[%s6 + $0x28] sm:$0xf] %v752
    %785 = vst [vmem:[%s6 + $0x2c] sm:$0xf] %v753
    %786 = vst [vmem:[%s6 + $0x30] sm:$0xf] %v754
    %787 = vst [vmem:[%s6 + $0x34] sm:$0xf] %v755
    %788 = vst [vmem:[%s6 + $0x38] sm:$0xf] %v756
    %789 = vst [vmem:[%s6 + $0x3c] sm:$0xf] %v757
    // Predicated region
    $region34: #{static_graph_encoder.2} parent=1 // pred_check
      _
    $region35: #{static_graph_encoder.2} parent=1 // pred_check_branch
      %791 = sbr.rel (0) target = $region37
    $region36: #{static_graph_encoder.2} parent=1 // pred_region
      _
    $region37: #{static_graph_encoder.2} parent=1 // pred_fallthru
      _
    // Predicated region
    $region38: #{static_graph_encoder.2} parent=1 // pred_check
      _
    $region39: #{static_graph_encoder.2} parent=1 // pred_check_branch
      %793 = sbr.rel (0) target = $region41
    $region40: #{static_graph_encoder.2} parent=1 // pred_region
      _
    $region41: #{static_graph_encoder.2} parent=1 // pred_fallthru
      _
    %794 = vsyncpa [#allocation3], 1
    %795 = vsyncpa [#allocation5], 1

</llo_original>
